<compile_context>
chip_gen: v6e
topology: v6e:2x2x1
jax: 0.10.0
libtpu: 0.0.40
codegen_flags: <defaults>
</compile_context>

<pallas_src>
import functools

import jax
import jax.numpy as jnp
from jax.experimental import pallas as pl
from jax.experimental.pallas import tpu as pltpu

MIB = 1024 * 1024


# -----------------------------------------------------------------------------
# Kernels
# -----------------------------------------------------------------------------
def _nmf_matmul_kernel(w_ref, h_ref, o_ref):
    # w_ref: (tm, k) f32, h_ref: (k, tn) f32, o_ref: (tm, tn) f32.
    # k = n_components is tiny, so the kernel is bound by the X_hat HBM store,
    # not the MXU; HIGHEST precision keeps torch.mm f32 semantics.
    o_ref[...] = jnp.dot(
        w_ref[...], h_ref[...],
        precision=jax.lax.Precision.HIGHEST,
        preferred_element_type=jnp.float32,
    ).astype(o_ref.dtype)


def _nmf_loss_kernel(x_ref, w_ref, h_ref, out_ref, acc_ref, *, m, n, tm, tn):
    # Fused reconstruction loss: stream X once, never write X_hat to HBM.
    # Grid: (row blocks i  -> "parallel", col blocks j -> "arbitrary" reduction).
    i = pl.program_id(0)
    j = pl.program_id(1)

    @pl.when(j == 0)
    def _():
        acc_ref[...] = jnp.zeros_like(acc_ref)

    x_hat = jnp.dot(
        w_ref[...], h_ref[...],
        precision=jax.lax.Precision.HIGHEST,
        preferred_element_type=jnp.float32,
    )
    diff = x_ref[...].astype(jnp.float32) - x_hat
    d2 = diff * diff

    # Mask ragged edge blocks (X/W/H are NOT padded in the wrapper; the
    # out-of-range part of an edge block holds unspecified data).  These are
    # static no-ops when the shapes divide the tiles evenly.
    if (m % tm) != 0:
        rows = i * tm + jax.lax.broadcasted_iota(jnp.int32, (tm, tn), 0)
        d2 = jnp.where(rows < m, d2, 0.0)
    if (n % tn) != 0:
        cols = j * tn + jax.lax.broadcasted_iota(jnp.int32, (tm, tn), 1)
        d2 = jnp.where(cols < n, d2, 0.0)

    # Reduce the (tm, tn) tile to an (8, 128) partial with pure VPU adds:
    #  * fold 8-row slabs via a layout-preserving leading-dim reshape,
    #  * fold 128-lane groups with vreg-aligned static slices.
    # No per-step XLU tree reduction, no per-step masked (1,1) store.
    folded = d2.reshape(tm // 8, 8, tn).sum(axis=0)          # (8, tn)
    part = folded[:, 0:128]
    for c in range(1, tn // 128):
        part = part + folded[:, c * 128:(c + 1) * 128]
    acc_ref[...] += part

    @pl.when(j == pl.num_programs(1) - 1)
    def _():
        out_ref[...] = acc_ref[...]


# -----------------------------------------------------------------------------
# Tiling / VMEM helpers
# -----------------------------------------------------------------------------
def _round_up(x, mult):
    return ((x + mult - 1) // mult) * mult


def _tpu_vmem_capacity_bytes():
    try:
        info = pltpu.get_tpu_info()
        cap = getattr(info, "vmem_capacity_bytes", None)
        if cap:
            return int(cap)
    except Exception:
        pass
    return 64 * MIB  # conservative fallback: v7x per-TensorCore VMEM


def _vmem_budget_and_limit():
    """Tile-footprint budget and the explicit scoped-VMEM limit, per chip."""
    cap = _tpu_vmem_capacity_bytes()
    # v5e/v6e (128 MiB physical) -> 64 MiB of tiles; v7x (64 MiB) -> 32 MiB.
    budget = max(16 * MIB, min(cap // 2, 64 * MIB))
    # Explicit limit (v5e scoped default is only 16 MiB, so it must be raised);
    # leave headroom below physical for Mosaic's internal scratch.
    limit = max(budget + 8 * MIB, min(cap - 8 * MIB, budget + 32 * MIB))
    return budget, limit


def _choose_tiles(m, n, k, budget_bytes, per_tile_out_bytes):
    """Pick (tm, tn) so the double-buffered VMEM footprint stays under budget.

    per_tile_out_bytes: bytes charged per big-tile element on this path
    (double-buffered f32 output for forward; double-buffered f32 X tile plus
    in-kernel f32 intermediates for the loss).
    """
    m8 = _round_up(max(m, 1), 8)
    n128 = _round_up(max(n, 1), 128)

    def fits(tm_, tn_):
        in_bytes = 2 * (tm_ * k * 4 + k * tn_ * 4)       # W/H, double-buffered
        return in_bytes + tm_ * tn_ * per_tile_out_bytes <= budget_bytes

    # Start big and shrink toward generous floors: multi-MiB output tiles keep
    # the kernel in the 85%+ HBM-roofline regime (per-step overhead amortized).
    tm = min(m8, 2048)
    tn = min(n128, 8192)
    tm_floor = min(m8, 512)
    tn_floor = min(n128, 2048)
    while not fits(tm, tn) and tm > tm_floor:
        tm = max(tm_floor, _round_up(tm // 2, 8))
    while not fits(tm, tn) and tn > tn_floor:
        tn = max(tn_floor, _round_up(tn // 2, 128))
    # Only reachable with pathological budgets; never collapses tm to 8.
    while not fits(tm, tn) and tn > 512:
        tn = max(512, _round_up(tn // 2, 128))
    while not fits(tm, tn) and tm > 256:
        tm = max(256, _round_up(tm // 2, 8))
    return tm, tn


def _maybe_split_for_two_cores(dim, tile, align):
    """If one block covers the whole axis, split it so a 'parallel' grid axis
    has >= 2 blocks for the second TensorCore (v7x megacore)."""
    if pl.cdiv(dim, tile) > 1:
        return tile
    half = _round_up(pl.cdiv(_round_up(max(dim, 1), align), 2), align)
    if half < tile and pl.cdiv(dim, half) >= 2:
        return half
    return tile


# -----------------------------------------------------------------------------
# Wrappers
# -----------------------------------------------------------------------------
def nmf_forward(W, H):
    """X_hat = W @ H via a Pallas TPU kernel (f32 in, f32 out)."""
    W = jnp.asarray(W, jnp.float32)
    H = jnp.asarray(H, jnp.float32)
    m, k = W.shape
    k2, n = H.shape
    assert k == k2
    budget, vmem_limit = _vmem_budget_and_limit()
    # Forward footprint: only the f32 output tile is large (8 B/elem w/ 2 bufs).
    tm, tn = _choose_tiles(m, n, k, budget, per_tile_out_bytes=8)
    if pl.cdiv(m, tm) == 1 and pl.cdiv(n, tn) == 1:
        tn = _maybe_split_for_two_cores(n, tn, 128)   # keep lane-dense blocks
    grid = (pl.cdiv(m, tm), pl.cdiv(n, tn))

    cost = pl.CostEstimate(
        flops=2 * m * n * k,
        transcendentals=0,
        bytes_accessed=m * k * 4 + k * n * 4 + m * n * 4,
    )
    return pl.pallas_call(
        _nmf_matmul_kernel,
        out_shape=jax.ShapeDtypeStruct((m, n), jnp.float32),
        grid=grid,
        in_specs=[
            pl.BlockSpec((tm, k), lambda i, j: (i, 0)),   # W rows advance with i
            pl.BlockSpec((k, tn), lambda i, j: (0, j)),   # H cols advance with j
        ],
        out_specs=pl.BlockSpec((tm, tn), lambda i, j: (i, j)),
        compiler_params=pltpu.CompilerParams(
            dimension_semantics=("parallel", "parallel"),
            vmem_limit_bytes=vmem_limit,
        ),
        cost_estimate=cost,
    )(W, H)


def nmf_reconstruction_loss(X, W, H):
    """||X - W@H||_F^2 fused in one kernel; X_hat never written to HBM."""
    X = jnp.asarray(X, jnp.float32)
    W = jnp.asarray(W, jnp.float32)
    H = jnp.asarray(H, jnp.float32)
    m, k = W.shape
    _, n = H.shape
    assert X.shape == (m, n)
    budget, vmem_limit = _vmem_budget_and_limit()
    # Loss footprint: double-buffered f32 X tile + ~2 f32 intermediates (x_hat,
    # diff) -> ~16 B per tile element.
    tm, tn = _choose_tiles(m, n, k, budget, per_tile_out_bytes=16)
    if pl.cdiv(m, tm) == 1:
        tm = _maybe_split_for_two_cores(m, tm, 8)       # axis 0 is the parallel one
    grid_m, grid_n = pl.cdiv(m, tm), pl.cdiv(n, tn)

    kernel = functools.partial(_nmf_loss_kernel, m=m, n=n, tm=tm, tn=tn)
    cost = pl.CostEstimate(
        flops=2 * m * n * k + 3 * m * n,
        transcendentals=0,
        bytes_accessed=m * n * 4 + m * k * 4 + k * n * 4 + grid_m * 8 * 128 * 4,
    )
    partials = pl.pallas_call(
        kernel,
        out_shape=jax.ShapeDtypeStruct((grid_m * 8, 128), jnp.float32),
        grid=(grid_m, grid_n),
        in_specs=[
            pl.BlockSpec((tm, tn), lambda i, j: (i, j)),  # X tile
            pl.BlockSpec((tm, k), lambda i, j: (i, 0)),   # W tile
            pl.BlockSpec((k, tn), lambda i, j: (0, j)),   # H tile
        ],
        # Per-row-block partial sums; resident across the j (reduction) axis.
        out_specs=pl.BlockSpec((8, 128), lambda i, j: (i, 0)),
        scratch_shapes=[pltpu.VMEM((8, 128), jnp.float32)],
        compiler_params=pltpu.CompilerParams(
            dimension_semantics=("parallel", "arbitrary"),
            vmem_limit_bytes=vmem_limit,
        ),
        cost_estimate=cost,
    )(X, W, H)
    # Tiny (grid_m*8, 128) partial -> scalar in plain JAX (better f32 accuracy
    # than one grid-wide scalar accumulator, and both v7x TCs stay busy).
    return jnp.sum(partials)


# -----------------------------------------------------------------------------
# Module equivalent
# -----------------------------------------------------------------------------
class UnsupervisedNMFJax:
    """JAX/Pallas equivalent of the PyTorch UnsupervisedNMF module."""

    def __init__(self, X, n_components, beta=0.01, rho=0.5, key=None):
        self.X = jnp.asarray(X, dtype=jnp.float32)
        m, n = self.X.shape
        self.n_components = n_components
        self.beta = beta
        self.rho = rho
        key = key if key is not None else jax.random.PRNGKey(0)
        kw, kh = jax.random.split(key)
        # TODO(synk): sklearn NMF(init='random', max_iter=100) warm-start has no
        # Pallas equivalent; deterministic non-negative random init used instead.
        self.W = jax.random.uniform(kw, (m, n_components), dtype=jnp.float32)
        self.H = jax.random.uniform(kh, (n_components, n), dtype=jnp.float32)

    def forward(self):
        return nmf_forward(self.W, self.H)

    def loss_function(self):
        recon = nmf_reconstruction_loss(self.X, self.W, self.H)
        l1 = jnp.sum(jnp.abs(self.H))
        l2 = jnp.sum(self.H * self.H)
        return recon + self.beta * (self.rho * l1 + (1.0 - self.rho) * l2)


# -----------------------------------------------------------------------------
# Demo / correctness check
# -----------------------------------------------------------------------------
if __name__ == "__main__":
    key = jax.random.PRNGKey(0)
    k_x, k_params = jax.random.split(key)

    m, n, n_components = 128, 256, 16
    # Non-negative data matrix (samples x features), as NMF expects.
    X = jax.random.uniform(k_x, (m, n), dtype=jnp.float32)

    model = UnsupervisedNMFJax(X, n_components=n_components, beta=0.01, rho=0.5,
                               key=k_params)

    X_hat = jax.block_until_ready(model.forward())
    assert X_hat.shape == (m, n)

    # Full-f32 reference (same HIGHEST-precision semantics as the kernel).
    ref = jnp.dot(model.W, model.H,
                  precision=jax.lax.Precision.HIGHEST,
                  preferred_element_type=jnp.float32)
    assert jnp.allclose(X_hat, ref, atol=1e-4, rtol=1e-4), "forward mismatch"

    # Fused loss vs. plain-JAX loss.
    loss = jax.block_until_ready(model.loss_function())
    diff = X - ref
    ref_loss = (jnp.sum(diff * diff)
                + 0.01 * (0.5 * jnp.sum(jnp.abs(model.H))
                          + 0.5 * jnp.sum(model.H * model.H)))
    assert jnp.isfinite(loss)
    assert jnp.allclose(loss, ref_loss, rtol=1e-4, atol=1e-2), "loss mismatch"

    print("KERNEL_OK")
</pallas_src>

<mosaic_0001>
module attributes {stable_mosaic.version = 11 : i64} {
  func.func @_nmf_matmul_kernel(%arg0: i32, %arg1: i32, %arg2: memref<128x16xf32, #tpu.memory_space<vmem>>, %arg3: memref<16x128xf32, #tpu.memory_space<vmem>>, %arg4: memref<128x128xf32, #tpu.memory_space<vmem>>) attributes {dimension_semantics = [#tpu.dimension_semantics<parallel>, #tpu.dimension_semantics<parallel>], iteration_bounds = array<i64: 1, 2>, scalar_prefetch = 0 : i64, scratch_operands = 0 : i64, tpu.core_type = #tpu.core_type<tc>, window_params = [{transform_indices = @transform_0, window_bounds = array<i64: 128, 16>}, {transform_indices = @transform_1, window_bounds = array<i64: 16, 128>}, {transform_indices = @transform_2, window_bounds = array<i64: 128, 128>}]} {
    %c0 = arith.constant 0 : index
    %c0_0 = arith.constant 0 : index
    %0 = vector.load %arg2[%c0, %c0_0] : memref<128x16xf32, #tpu.memory_space<vmem>>, vector<128x16xf32>
    %c0_1 = arith.constant 0 : index
    %c0_2 = arith.constant 0 : index
    %1 = vector.load %arg3[%c0_1, %c0_2] : memref<16x128xf32, #tpu.memory_space<vmem>>, vector<16x128xf32>
    %cst = arith.constant dense<0.000000e+00> : vector<128x128xf32>
    %2 = tpu.matmul %0, %1, %cst {dimension_numbers = #tpu.dot_dimension_numbers<[1], [0], [0], [1], [0, 0, 1, 1], [], []>, precision = #tpu.contract_precision<fp32>} : vector<128x16xf32>, vector<16x128xf32>, vector<128x128xf32> -> vector<128x128xf32>
    %c0_3 = arith.constant 0 : index
    %c0_4 = arith.constant 0 : index
    %3 = vector.load %arg4[%c0_3, %c0_4] : memref<128x128xf32, #tpu.memory_space<vmem>>, vector<128x128xf32>
    tpu.vector_store %arg4[%c0_3, %c0_4], %2 {strides = array<i32>} : memref<128x128xf32, #tpu.memory_space<vmem>>, vector<128x128xf32>,
    return
  }
  func.func @transform_0(%arg0: i32, %arg1: i32) -> (i32, i32) {
    %c0_i32 = arith.constant 0 : i32
    %c0_i32_0 = arith.constant 0 : i32
    return %arg0, %c0_i32 : i32, i32
  }
  func.func @transform_1(%arg0: i32, %arg1: i32) -> (i32, i32) {
    %c0_i32 = arith.constant 0 : i32
    %c0_i32_0 = arith.constant 0 : i32
    return %c0_i32, %arg1 : i32, i32
  }
  func.func @transform_2(%arg0: i32, %arg1: i32) -> (i32, i32) {
    %c0_i32 = arith.constant 0 : i32
    return %arg0, %arg1 : i32, i32
  }
}

</mosaic_0001>

<llo_original>
// kernel: tpu_custom_call.1
$region0: #{tpu_custom_call.1}
  #allocation0 [shape = 'u32[]', space=smem, size = 0x4, offset = 0x4, fixed_abs, tag = 'smem constant byte address 0x4 - core index']
  #allocation1 [shape = 'u32[144,128]{1,0:T(1,128)}', space=vmem, size = 0x12000, scoped, tag = 'internal scratch']
  %s0 = inlined_call_operand.vmem [shape: f32[128,16], index: 0, kind: input, shape index: {}]
  %s1 = inlined_call_operand.vmem [shape: f32[16,256], index: 1, kind: input, shape index: {}]
  %s2 = inlined_call_operand.hbm [shape: f32[128,256], index: 2, kind: output, shape index: {}]
  %s3 = sld [smem:[#allocation0]]
  $region79: #{tpu_custom_call.1} parent=0
    _
  %s5 = ssub.s32 1, %s3
  %s6 = scalar_select 0, %s5, %s3
  $region1: #{tpu_custom_call.1} parent=0
    #allocation2 [shape = 'u8[16384]{0}', space=vmem, size = 0x4000, scoped, tag = 'input window, operand 1']
    #allocation3 [shape = 'u8[131072]{0}', space=vmem, size = 0x20000, scoped, tag = 'output window, operand 0']
    #allocation4 [shape = 's32[2]{0}', space=sflag, size = 0x8, scoped, tag = 'scoped memory for tpu_custom_call.1']
    %7 = vsyncpa [#allocation4], 0
    %s8 = scalar_lea.sflag [#allocation4], 1
    %9 = vsyncpa %s8, 0
    loop: start=0, step=1, limit=4
    $region2: #{tpu_custom_call.1} parent=1 // loop_pre_header
      _
    $region3: #{tpu_custom_call.1} parent=1 // loop_header
      %s11 = sphi 0, %s15
      %p12 = scmp.ge.s32.totalorder %s11, 4
      %s18 = sphi 0, %s30
      %s19 = sphi 0, %s26
      %s20 = sphi 0, %s18
      %s21 = sphi 0, %s19
      %s22 = sphi 0, %s20
      %s23 = sphi 0, %s21
      %s33 = sphi 0, %s35
      %s36 = sphi 0, %s33
      %s37 = sphi 0, %s36
      %s53 = sphi 0, %s37
      %s59 = sphi 0, %s61
      %s62 = sphi 0, %s59
      %s63 = sphi 0, %s62
      %s79 = sphi 0, %s63
      %s87 = sphi 0, %s89
      %s90 = sphi 0, %s87
      %s91 = sphi 0, %s90
      %s107 = sphi 0, %s91
    $region4: #{tpu_custom_call.1} parent=1 // loop_header_branch
      %14 = sbr.rel (%p12) target = $region8
    $region5: #{tpu_custom_call.1} parent=1 // loop_body
      %s16 = ssub.s32 %s11, 1
      %s17 = ssub.s32 %s11, 2
      %s24 = sadd.s32 1, %s19
      %p25 = scmp.ge.s32.totalorder %s24, 2
      %s26 = scalar_select %p25, 0, %s24
      %s27 = sadd.s32 1, %s18
      %s28 = scalar_select %p25, %s27, %s18
      %p29 = scmp.ge.s32.totalorder %s28, 1
      %s30 = scalar_select %p29, 0, %s28
      %s31 = ssub.s32 %s18, %s30
      %p32 = scmp.eq.s32.totalorder %s31, 0
      %s34 = sadd.s32 %s33, 1
      %s35 = scalar_select %p32, %s33, %s34
      %p38 = pneg %p32
      %p39 = scmp.eq.s32.totalorder %s11, 1
      %p40 = por %p38, %p39
      %p41 = scmp.ne.s32.totalorder %s33, %s36
      %p42 = scmp.eq.s32.totalorder %s11, 0
      %p43 = por %p41, %p42
      %p44 = scmp.ne.s32.totalorder %s33, %s36
      %p45 = scmp.eq.s32.totalorder %s16, 1
      %p46 = por %p44, %p45
      %p47 = scmp.ne.s32.totalorder %s36, %s37
      %p48 = scmp.eq.s32.totalorder %s16, 0
      %p49 = por %p47, %p48
      %p50 = scmp.ne.s32.totalorder %s36, %s37
      %p51 = scmp.eq.s32.totalorder %s17, 1
      %p52 = por %p50, %p51
      %p54 = scmp.ne.s32.totalorder %s37, %s53
      %p55 = scmp.eq.s32.totalorder %s17, 0
      %p56 = por %p54, %p55
      %s57 = ssub.s32 %s19, %s26
      %p58 = scmp.eq.s32.totalorder %s57, 0
      %s60 = sadd.s32 %s59, 1
      %s61 = scalar_select %p58, %s59, %s60
      %p64 = pneg %p58
      %p65 = scmp.eq.s32.totalorder %s11, 1
      %p66 = por %p64, %p65
      %p67 = scmp.ne.s32.totalorder %s59, %s62
      %p68 = scmp.eq.s32.totalorder %s11, 0
      %p69 = por %p67, %p68
      %p70 = scmp.ne.s32.totalorder %s59, %s62
      %p71 = scmp.eq.s32.totalorder %s16, 1
      %p72 = por %p70, %p71
      %p73 = scmp.ne.s32.totalorder %s62, %s63
      %p74 = scmp.eq.s32.totalorder %s16, 0
      %p75 = por %p73, %p74
      %p76 = scmp.ne.s32.totalorder %s62, %s63
      %p77 = scmp.eq.s32.totalorder %s17, 1
      %p78 = por %p76, %p77
      %p80 = scmp.ne.s32.totalorder %s63, %s79
      %p81 = scmp.eq.s32.totalorder %s17, 0
      %p82 = por %p80, %p81
      %s83 = ssub.s32 %s18, %s30
      %s84 = ssub.s32 %s19, %s26
      %s85 = sor.u32 %s83, %s84
      %p86 = scmp.eq.s32.totalorder %s85, 0
      %s88 = sadd.s32 %s87, 1
      %s89 = scalar_select %p86, %s87, %s88
      %p92 = pneg %p86
      %p93 = scmp.eq.s32.totalorder %s11, 1
      %p94 = por %p92, %p93
      %p95 = scmp.ne.s32.totalorder %s87, %s90
      %p96 = scmp.eq.s32.totalorder %s11, 0
      %p97 = por %p95, %p96
      %p98 = scmp.ne.s32.totalorder %s87, %s90
      %p99 = scmp.eq.s32.totalorder %s16, 1
      %p100 = por %p98, %p99
      %p101 = scmp.ne.s32.totalorder %s90, %s91
      %p102 = scmp.eq.s32.totalorder %s16, 0
      %p103 = por %p101, %p102
      %p104 = scmp.ne.s32.totalorder %s90, %s91
      %p105 = scmp.eq.s32.totalorder %s17, 1
      %p106 = por %p104, %p105
      %p108 = scmp.ne.s32.totalorder %s91, %s107
      %p109 = scmp.eq.s32.totalorder %s17, 0
      %p110 = por %p108, %p109
      %p111 = scmp.le.s32.totalorder 1, %s11
      %p112 = scmp.lt.s32.totalorder %s11, 3
      %p113 = pnand %p111, %p112
      %p114 = pneg %p113
      // Predicated region
      $region9: #{tpu_custom_call.1} parent=5 // pred_check
        _
      $region10: #{tpu_custom_call.1} parent=5 // pred_check_branch
        %116 = sbr.rel (%p113) target = $region12
      $region11: #{tpu_custom_call.1} parent=5 // pred_region
        %s117 = ssub.s32 %s11, 1
        // Predicated region
        $region13: #{tpu_custom_call.1} parent=11 // pred_check
          %p118 = pneg %p49
        $region14: #{tpu_custom_call.1} parent=11 // pred_check_branch
          %120 = sbr.rel (%p118) target = $region16
        $region15: #{tpu_custom_call.1} parent=11 // pred_region
          %s121 = smul.u32 16, %s20
          %p122 = scmp.lt.s32.totalorder %s121, 15
          %s123 = scalar_select %p122, %s121, 15
          %s124 = smul.addr %s123, 8
          %s125 = scalar_lea.vmem %s0, %s124
          %s126 = smul.u32 16, %s20
        $region16: #{tpu_custom_call.1} parent=11 // pred_fallthru
          _
      $region12: #{tpu_custom_call.1} parent=5 // pred_fallthru
        _
      %p127 = scmp.lt.s32.totalorder %s11, 2
      // Predicated region
      $region17: #{tpu_custom_call.1} parent=5 // pred_check
        %p128 = pneg %p127
      $region18: #{tpu_custom_call.1} parent=5 // pred_check_branch
        %130 = sbr.rel (%p128) target = $region20
      $region19: #{tpu_custom_call.1} parent=5 // pred_region
        // Predicated region
        $region21: #{tpu_custom_call.1} parent=19 // pred_check
          %p131 = pneg %p69
        $region22: #{tpu_custom_call.1} parent=19 // pred_check_branch
          %133 = sbr.rel (%p131) target = $region24
        $region23: #{tpu_custom_call.1} parent=19 // pred_region
          %s134 = sand.u32 %s59, 1
          %s135 = sand.u32 %s59, 1
          %s136 = smul.addr %s135, 16
          %s137 = scalar_lea.vmem [#allocation2], %s136
          %s138 = smul.addr %s19, 8
          %s139 = scalar_lea.vmem %s1, %s138
          // Predicated region
          $region25: #{tpu_custom_call.1} parent=23 // pred_check
            _
          $region26: #{tpu_custom_call.1} parent=23 // pred_check_branch
            %141 = sbr.rel (0) target = $region28
          $region27: #{tpu_custom_call.1} parent=23 // pred_region
            // Predicated region
            $region29: #{tpu_custom_call.1} parent=27 // pred_check
              _
            $region30: #{tpu_custom_call.1} parent=27 // pred_check_branch
              %143 = sbr.rel (0) target = $region32
            $region31: #{tpu_custom_call.1} parent=27 // pred_region
              // Predicated region
              $region44: #{tpu_custom_call.1} parent=31 // pred_check
                _
              $region45: #{tpu_custom_call.1} parent=31 // pred_check_branch
                %161 = sbr.rel (0) target = $region47
              $region46: #{tpu_custom_call.1} parent=31 // pred_region
                loop: start=0, step=1, limit=1
                $region48: #{tpu_custom_call.1} parent=46 // loop_pre_header
                  _
                $region49: #{tpu_custom_call.1} parent=46 // loop_header
                  %s163 = sphi 0, %s167
                  %p164 = scmp.ge.s32.totalorder %s163, 1
                  %s168 = sphi %s139, %s139
                  %s169 = sphi %s137, %s137
                $region50: #{tpu_custom_call.1} parent=46 // loop_header_branch
                  %166 = sbr.rel (%p164) target = $region54
                $region51: #{tpu_custom_call.1} parent=46 // loop_body
                  %v170 = vld [vmem:[%s168] sm:$0xff]
                  %171 = vst [vmem:[%s169] sm:$0xff] %v170
                  %v172 = vld [vmem:[%s168 + $0x10] sm:$0xff]
                  %173 = vst [vmem:[%s169 + $0x8] sm:$0xff] %v172
                $region52: #{tpu_custom_call.1} parent=46 // loop_footer
                  %s167 = sadd.s32 1, %s163
                $region53: #{tpu_custom_call.1} parent=46 // loop_footer_branch
                  %162 = sbr.rel target = $region49
                $region54: #{tpu_custom_call.1} parent=46 // loop_exit
                  _
              $region47: #{tpu_custom_call.1} parent=31 // pred_fallthru
                _
              // Predicated region
              $region55: #{tpu_custom_call.1} parent=31 // pred_check
                _
              $region56: #{tpu_custom_call.1} parent=31 // pred_check_branch
                %175 = sbr.rel target = $region58
              $region57: #{tpu_custom_call.1} parent=31 // pred_region
                _
              $region58: #{tpu_custom_call.1} parent=31 // pred_fallthru
                _
            $region32: #{tpu_custom_call.1} parent=27 // pred_fallthru
              _
            // Predicated region
            $region33: #{tpu_custom_call.1} parent=27 // pred_check
              _
            $region34: #{tpu_custom_call.1} parent=27 // pred_check_branch
              %145 = sbr.rel target = $region36
            $region35: #{tpu_custom_call.1} parent=27 // pred_region
              %s147 = ssub.s32 256, 1
              loop: start=0, step=1, limit=1
              $region37: #{tpu_custom_call.1} parent=35 // loop_pre_header
                _
              $region38: #{tpu_custom_call.1} parent=35 // loop_header
                %s149 = sphi 0, %s153
                %p150 = scmp.ge.s32.totalorder %s149, 1
                %s154 = sphi %s139, %s139
                %s155 = sphi %s137, %s137
              $region39: #{tpu_custom_call.1} parent=35 // loop_header_branch
                %152 = sbr.rel (%p150) target = $region43
              $region40: #{tpu_custom_call.1} parent=35 // loop_body
                %v156 = vld [vmem:[%s154] sm:%s147]
                %157 = vst [vmem:[%s155] sm:%s147] %v156
                %v158 = vld [vmem:[%s154 + $0x10] sm:%s147]
                %159 = vst [vmem:[%s155 + $0x8] sm:%s147] %v158
              $region41: #{tpu_custom_call.1} parent=35 // loop_footer
                %s153 = sadd.s32 1, %s149
              $region42: #{tpu_custom_call.1} parent=35 // loop_footer_branch
                %148 = sbr.rel target = $region38
              $region43: #{tpu_custom_call.1} parent=35 // loop_exit
                _
            $region36: #{tpu_custom_call.1} parent=27 // pred_fallthru
              _
          $region28: #{tpu_custom_call.1} parent=23 // pred_fallthru
            _
          %176 = vnop
        $region24: #{tpu_custom_call.1} parent=19 // pred_fallthru
          _
      $region20: #{tpu_custom_call.1} parent=5 // pred_fallthru
        _
      %p177 = scmp.le.s32.totalorder 1, %s11
      %p178 = scmp.lt.s32.totalorder %s11, 3
      %p179 = pnand %p177, %p178
      %p180 = pneg %p179
      // Predicated region
      $region59: #{tpu_custom_call.1} parent=5 // pred_check
        _
      $region60: #{tpu_custom_call.1} parent=5 // pred_check_branch
        %182 = sbr.rel (%p179) target = $region62
      $region61: #{tpu_custom_call.1} parent=5 // pred_region
        %s183 = ssub.s32 %s11, 1
        %s184 = sand.u32 %s62, 1
        %s185 = sand.u32 %s62, 1
        %s186 = smul.addr %s185, 16
        %s187 = scalar_lea.vmem [#allocation2], %s186
        // Predicated region
        $region63: #{tpu_custom_call.1} parent=61 // pred_check
          %p188 = pneg %p75
        $region64: #{tpu_custom_call.1} parent=61 // pred_check_branch
          %190 = sbr.rel (%p188) target = $region66
        $region65: #{tpu_custom_call.1} parent=61 // pred_region
          _
        $region66: #{tpu_custom_call.1} parent=61 // pred_fallthru
          _
        %s191 = smul.u32 16, %s20
        %p192 = scmp.lt.s32.totalorder %s191, 15
        %s193 = scalar_select %p192, %s191, 15
        %s194 = smul.addr %s193, 8
        %s195 = scalar_lea.vmem %s0, %s194
        %p196 = pneg %p49
        %p197 = pneg %p46
        %s198 = sand.u32 %s62, 1
        %s199 = sand.u32 %s62, 1
        %s200 = smul.addr %s199, 16
        %s201 = scalar_lea.vmem [#allocation2], %s200
        %p202 = pneg %p75
        %p203 = pneg %p72
        %p204 = pneg %p103
        %p205 = pneg %p100
        %s206 = sand.u32 %s90, 1
        %s207 = scalar_lea.sflag [#allocation4], %s206
        %s208 = sand.u32 %s90, 1
        %s209 = smul.addr %s208, 128
        %s210 = scalar_lea.vmem [#allocation3], %s209
        %s211 = smul.u32 16, %s20
        %p212 = scmp.lt.s32.totalorder %s211, 15
        %s213 = scalar_select %p212, %s211, 15
        %s214 = smul.addr %s213, 8
        %s215 = scalar_lea.vmem %s0, %s214
        %s216 = smul.u32 16, %s20
        %s217 = smul.u32 16, %s20
        %v218 = vld [vmem:[%s215] sm:$0xff]
        %v219 = vld [vmem:[%s215 + $0x8] sm:$0xff]
        %v220 = vld [vmem:[%s215 + $0x10] sm:$0xff]
        %v221 = vld [vmem:[%s215 + $0x18] sm:$0xff]
        %v222 = vld [vmem:[%s215 + $0x20] sm:$0xff]
        %v223 = vld [vmem:[%s215 + $0x28] sm:$0xff]
        %v224 = vld [vmem:[%s215 + $0x30] sm:$0xff]
        %v225 = vld [vmem:[%s215 + $0x38] sm:$0xff]
        %v226 = vld [vmem:[%s215 + $0x40] sm:$0xff]
        %v227 = vld [vmem:[%s215 + $0x48] sm:$0xff]
        %v228 = vld [vmem:[%s215 + $0x50] sm:$0xff]
        %v229 = vld [vmem:[%s215 + $0x58] sm:$0xff]
        %v230 = vld [vmem:[%s215 + $0x60] sm:$0xff]
        %v231 = vld [vmem:[%s215 + $0x68] sm:$0xff]
        %v232 = vld [vmem:[%s215 + $0x70] sm:$0xff]
        %v233 = vld [vmem:[%s215 + $0x78] sm:$0xff]
        %v234 = vld [vmem:[%s187] sm:$0xff]
        %v235 = vld [vmem:[%s187 + $0x8] sm:$0xff]
        %vm236 = vcmask 130048
        %v238 = vsel %vm236, %v218, 0
        %v241 = vsel %vm236, %v219, 0
        %v244 = vsel %vm236, %v220, 0
        %v247 = vsel %vm236, %v221, 0
        %v250 = vsel %vm236, %v222, 0
        %v253 = vsel %vm236, %v223, 0
        %v256 = vsel %vm236, %v224, 0
        %v259 = vsel %vm236, %v225, 0
        %v262 = vsel %vm236, %v226, 0
        %v265 = vsel %vm236, %v227, 0
        %v268 = vsel %vm236, %v228, 0
        %v271 = vsel %vm236, %v229, 0
        %v274 = vsel %vm236, %v230, 0
        %v277 = vsel %vm236, %v231, 0
        %v280 = vsel %vm236, %v232, 0
        %v283 = vsel %vm236, %v233, 0
        %285 = vmatprep.subr.mxu0 0.0
        %286 = vmatpush1.msra.mxu0 0.0
        %287 = vmatprep.subr.mxu0 0.0
        %288 = vmatpush1.msra.mxu0 0.0
        %289 = vmatprep.subr.mxu0 0.0
        %290 = vmatpush1.msra.mxu0 0.0
        %291 = vmatprep.subr.mxu0 0.0
        %292 = vmatpush1.msra.mxu0 0.0
        %293 = vmatprep.subr.mxu0 0.0
        %294 = vmatpush1.msra.mxu0 0.0
        %295 = vmatprep.subr.mxu0 0.0
        %296 = vmatpush1.msra.mxu0 0.0
        %297 = vmatprep.subr.mxu0 0.0
        %298 = vmatpush1.msra.mxu0 0.0
        %299 = vmatprep.subr.mxu0 0.0
        %300 = vmatpush1.msra.mxu0 0.0
        %301 = vmatprep.subr.mxu0 0.0
        %302 = vmatpush1.msra.mxu0 0.0
        %303 = vmatprep.subr.mxu0 0.0
        %304 = vmatpush1.msra.mxu0 0.0
        %305 = vmatprep.subr.mxu0 0.0
        %306 = vmatpush1.msra.mxu0 0.0
        %307 = vmatprep.subr.mxu0 0.0
        %308 = vmatpush1.msra.mxu0 0.0
        %309 = vmatprep.subr.mxu0 0.0
        %310 = vmatpush1.msra.mxu0 0.0
        %311 = vmatprep.subr.mxu0 0.0
        %312 = vmatpush1.msra.mxu0 0.0
        %313 = vmatprep.subr.mxu0 0.0
        %v314 = vand.u32 %v235, 4294901760
        %315 = vmatpush1.msra.mxu0 %v314
        %316 = vmatprep.subr.mxu0 0.0
        %v317 = vand.u32 %v234, 4294901760
        %318 = vmatpush1.msra.mxu0 %v317
        %319 = vmatprep.subr.mxu0 0.0
        %320 = vmatpush2.msra.mxu0 0.0
        %321 = vmatprep.subr.mxu0 0.0
        %322 = vmatpush2.msra.mxu0 0.0
        %323 = vmatprep.subr.mxu0 0.0
        %324 = vmatpush2.msra.mxu0 0.0
        %325 = vmatprep.subr.mxu0 0.0
        %326 = vmatpush2.msra.mxu0 0.0
        %327 = vmatprep.subr.mxu0 0.0
        %328 = vmatpush2.msra.mxu0 0.0
        %329 = vmatprep.subr.mxu0 0.0
        %330 = vmatpush2.msra.mxu0 0.0
        %331 = vmatprep.subr.mxu0 0.0
        %332 = vmatpush2.msra.mxu0 0.0
        %333 = vmatprep.subr.mxu0 0.0
        %334 = vmatpush2.msra.mxu0 0.0
        %335 = vmatprep.subr.mxu0 0.0
        %336 = vmatpush2.msra.mxu0 0.0
        %337 = vmatprep.subr.mxu0 0.0
        %338 = vmatpush2.msra.mxu0 0.0
        %339 = vmatprep.subr.mxu0 0.0
        %340 = vmatpush2.msra.mxu0 0.0
        %341 = vmatprep.subr.mxu0 0.0
        %342 = vmatpush2.msra.mxu0 0.0
        %343 = vmatprep.subr.mxu0 0.0
        %344 = vmatpush2.msra.mxu0 0.0
        %345 = vmatprep.subr.mxu0 0.0
        %346 = vmatpush2.msra.mxu0 0.0
        %347 = vmatprep.subr.mxu0 0.0
        %348 = vmatpush2.msra.mxu0 0.0
        %349 = vmatprep.subr.mxu0 0.0
        %350 = vmatpush2.msra.mxu0 0.0
        %351 = vmatprep.mubr.f32.mxu0 0.0
        %v352 = vand.u32 %v238, 4294901760
        %v353 = vsub.f32 %v238, %v352
        %v354 = vand.u32 %v353, 4294901760
        %v355 = vsub.f32 %v353, %v354
        %v356 = vand.u32 %v355, 4294901760
        %357 = vmatmul.mubr.f32.gmra.mxu0 %v356
        %v358 = vpop.f32.mrf.mxu0
        %v359 = vadd.f32 0.0, %v358
        %v360 = vpop.f32.mrf.mxu0
        %361 = vmatprep.mubr.f32.mxu0 0.0
        %v362 = vand.u32 %v241, 4294901760
        %v363 = vsub.f32 %v241, %v362
        %v364 = vand.u32 %v363, 4294901760
        %v365 = vsub.f32 %v363, %v364
        %v366 = vand.u32 %v365, 4294901760
        %367 = vmatmul.mubr.f32.gmra.mxu0 %v366
        %v368 = vpop.f32.mrf.mxu0
        %v369 = vadd.f32 0.0, %v368
        %v370 = vpop.f32.mrf.mxu0
        %371 = vmatprep.mubr.f32.mxu0 0.0
        %v372 = vand.u32 %v244, 4294901760
        %v373 = vsub.f32 %v244, %v372
        %v374 = vand.u32 %v373, 4294901760
        %v375 = vsub.f32 %v373, %v374
        %v376 = vand.u32 %v375, 4294901760
        %377 = vmatmul.mubr.f32.gmra.mxu0 %v376
        %v378 = vpop.f32.mrf.mxu0
        %v379 = vadd.f32 0.0, %v378
        %v380 = vpop.f32.mrf.mxu0
        %381 = vmatprep.mubr.f32.mxu0 0.0
        %v382 = vand.u32 %v247, 4294901760
        %v383 = vsub.f32 %v247, %v382
        %v384 = vand.u32 %v383, 4294901760
        %v385 = vsub.f32 %v383, %v384
        %v386 = vand.u32 %v385, 4294901760
        %387 = vmatmul.mubr.f32.gmra.mxu0 %v386
        %v388 = vpop.f32.mrf.mxu0
        %v389 = vadd.f32 0.0, %v388
        %v390 = vpop.f32.mrf.mxu0
        %391 = vmatprep.mubr.f32.mxu0 0.0
        %v392 = vand.u32 %v250, 4294901760
        %v393 = vsub.f32 %v250, %v392
        %v394 = vand.u32 %v393, 4294901760
        %v395 = vsub.f32 %v393, %v394
        %v396 = vand.u32 %v395, 4294901760
        %397 = vmatmul.mubr.f32.gmra.mxu0 %v396
        %v398 = vpop.f32.mrf.mxu0
        %v399 = vadd.f32 0.0, %v398
        %v400 = vpop.f32.mrf.mxu0
        %401 = vmatprep.mubr.f32.mxu0 0.0
        %v402 = vand.u32 %v253, 4294901760
        %v403 = vsub.f32 %v253, %v402
        %v404 = vand.u32 %v403, 4294901760
        %v405 = vsub.f32 %v403, %v404
        %v406 = vand.u32 %v405, 4294901760
        %407 = vmatmul.mubr.f32.gmra.mxu0 %v406
        %v408 = vpop.f32.mrf.mxu0
        %v409 = vadd.f32 0.0, %v408
        %v410 = vpop.f32.mrf.mxu0
        %411 = vmatprep.mubr.f32.mxu0 0.0
        %v412 = vand.u32 %v256, 4294901760
        %v413 = vsub.f32 %v256, %v412
        %v414 = vand.u32 %v413, 4294901760
        %v415 = vsub.f32 %v413, %v414
        %v416 = vand.u32 %v415, 4294901760
        %417 = vmatmul.mubr.f32.gmra.mxu0 %v416
        %v418 = vpop.f32.mrf.mxu0
        %v419 = vadd.f32 0.0, %v418
        %v420 = vpop.f32.mrf.mxu0
        %421 = vmatprep.mubr.f32.mxu0 0.0
        %v422 = vand.u32 %v259, 4294901760
        %v423 = vsub.f32 %v259, %v422
        %v424 = vand.u32 %v423, 4294901760
        %v425 = vsub.f32 %v423, %v424
        %v426 = vand.u32 %v425, 4294901760
        %427 = vmatmul.mubr.f32.gmra.mxu0 %v426
        %v428 = vpop.f32.mrf.mxu0
        %v429 = vadd.f32 0.0, %v428
        %v430 = vpop.f32.mrf.mxu0
        %431 = vmatprep.mubr.f32.mxu0 0.0
        %v432 = vand.u32 %v262, 4294901760
        %v433 = vsub.f32 %v262, %v432
        %v434 = vand.u32 %v433, 4294901760
        %v435 = vsub.f32 %v433, %v434
        %v436 = vand.u32 %v435, 4294901760
        %437 = vmatmul.mubr.f32.gmra.mxu0 %v436
        %v438 = vpop.f32.mrf.mxu0
        %v439 = vadd.f32 0.0, %v438
        %v440 = vpop.f32.mrf.mxu0
        %441 = vmatprep.mubr.f32.mxu0 0.0
        %v442 = vand.u32 %v265, 4294901760
        %v443 = vsub.f32 %v265, %v442
        %v444 = vand.u32 %v443, 4294901760
        %v445 = vsub.f32 %v443, %v444
        %v446 = vand.u32 %v445, 4294901760
        %447 = vmatmul.mubr.f32.gmra.mxu0 %v446
        %v448 = vpop.f32.mrf.mxu0
        %v449 = vadd.f32 0.0, %v448
        %v450 = vpop.f32.mrf.mxu0
        %451 = vmatprep.mubr.f32.mxu0 0.0
        %v452 = vand.u32 %v268, 4294901760
        %v453 = vsub.f32 %v268, %v452
        %v454 = vand.u32 %v453, 4294901760
        %v455 = vsub.f32 %v453, %v454
        %v456 = vand.u32 %v455, 4294901760
        %457 = vmatmul.mubr.f32.gmra.mxu0 %v456
        %v458 = vpop.f32.mrf.mxu0
        %v459 = vadd.f32 0.0, %v458
        %v460 = vpop.f32.mrf.mxu0
        %461 = vmatprep.mubr.f32.mxu0 0.0
        %v462 = vand.u32 %v271, 4294901760
        %v463 = vsub.f32 %v271, %v462
        %v464 = vand.u32 %v463, 4294901760
        %v465 = vsub.f32 %v463, %v464
        %v466 = vand.u32 %v465, 4294901760
        %467 = vmatmul.mubr.f32.gmra.mxu0 %v466
        %v468 = vpop.f32.mrf.mxu0
        %v469 = vadd.f32 0.0, %v468
        %v470 = vpop.f32.mrf.mxu0
        %471 = vmatprep.mubr.f32.mxu0 0.0
        %v472 = vand.u32 %v274, 4294901760
        %v473 = vsub.f32 %v274, %v472
        %v474 = vand.u32 %v473, 4294901760
        %v475 = vsub.f32 %v473, %v474
        %v476 = vand.u32 %v475, 4294901760
        %477 = vmatmul.mubr.f32.gmra.mxu0 %v476
        %v478 = vpop.f32.mrf.mxu0
        %v479 = vadd.f32 0.0, %v478
        %v480 = vpop.f32.mrf.mxu0
        %481 = vmatprep.mubr.f32.mxu0 0.0
        %v482 = vand.u32 %v277, 4294901760
        %v483 = vsub.f32 %v277, %v482
        %v484 = vand.u32 %v483, 4294901760
        %v485 = vsub.f32 %v483, %v484
        %v486 = vand.u32 %v485, 4294901760
        %487 = vmatmul.mubr.f32.gmra.mxu0 %v486
        %v488 = vpop.f32.mrf.mxu0
        %v489 = vadd.f32 0.0, %v488
        %v490 = vpop.f32.mrf.mxu0
        %491 = vmatprep.mubr.f32.mxu0 0.0
        %v492 = vand.u32 %v280, 4294901760
        %v493 = vsub.f32 %v280, %v492
        %v494 = vand.u32 %v493, 4294901760
        %v495 = vsub.f32 %v493, %v494
        %v496 = vand.u32 %v495, 4294901760
        %497 = vmatmul.mubr.f32.gmra.mxu0 %v496
        %v498 = vpop.f32.mrf.mxu0
        %v499 = vadd.f32 0.0, %v498
        %v500 = vpop.f32.mrf.mxu0
        %501 = vmatprep.mubr.f32.mxu0 0.0
        %v502 = vand.u32 %v283, 4294901760
        %v503 = vsub.f32 %v283, %v502
        %v504 = vand.u32 %v503, 4294901760
        %v505 = vsub.f32 %v503, %v504
        %v506 = vand.u32 %v505, 4294901760
        %507 = vmatmul.mubr.f32.gmra.mxu0 %v506
        %v508 = vpop.f32.mrf.mxu0
        %v509 = vadd.f32 0.0, %v508
        %v510 = vpop.f32.mrf.mxu0
        %511 = vdwg.mxu0
        %512 = vmatprep.subr.mxu0 0.0
        %513 = vmatpush1.msra.mxu0 0.0
        %514 = vmatprep.subr.mxu0 0.0
        %515 = vmatpush1.msra.mxu0 0.0
        %516 = vmatprep.subr.mxu0 0.0
        %517 = vmatpush1.msra.mxu0 0.0
        %518 = vmatprep.subr.mxu0 0.0
        %519 = vmatpush1.msra.mxu0 0.0
        %520 = vmatprep.subr.mxu0 0.0
        %521 = vmatpush1.msra.mxu0 0.0
        %522 = vmatprep.subr.mxu0 0.0
        %523 = vmatpush1.msra.mxu0 0.0
        %524 = vmatprep.subr.mxu0 0.0
        %525 = vmatpush1.msra.mxu0 0.0
        %526 = vmatprep.subr.mxu0 0.0
        %527 = vmatpush1.msra.mxu0 0.0
        %528 = vmatprep.subr.mxu0 0.0
        %529 = vmatpush1.msra.mxu0 0.0
        %530 = vmatprep.subr.mxu0 0.0
        %531 = vmatpush1.msra.mxu0 0.0
        %532 = vmatprep.subr.mxu0 0.0
        %533 = vmatpush1.msra.mxu0 0.0
        %534 = vmatprep.subr.mxu0 0.0
        %535 = vmatpush1.msra.mxu0 0.0
        %536 = vmatprep.subr.mxu0 0.0
        %537 = vmatpush1.msra.mxu0 0.0
        %538 = vmatprep.subr.mxu0 0.0
        %539 = vmatpush1.msra.mxu0 0.0
        %540 = vmatprep.subr.mxu0 0.0
        %v541 = vand.u32 %v235, 4294901760
        %v542 = vsub.f32 %v235, %v541
        %v543 = vand.u32 %v542, 4294901760
        %v544 = vsub.f32 %v542, %v543
        %v545 = vand.u32 %v544, 4294901760
        %546 = vmatpush1.msra.mxu0 %v545
        %547 = vmatprep.subr.mxu0 0.0
        %v548 = vand.u32 %v234, 4294901760
        %v549 = vsub.f32 %v234, %v548
        %v550 = vand.u32 %v549, 4294901760
        %v551 = vsub.f32 %v549, %v550
        %v552 = vand.u32 %v551, 4294901760
        %553 = vmatpush1.msra.mxu0 %v552
        %554 = vmatprep.subr.mxu0 0.0
        %555 = vmatpush2.msra.mxu0 0.0
        %556 = vmatprep.subr.mxu0 0.0
        %557 = vmatpush2.msra.mxu0 0.0
        %558 = vmatprep.subr.mxu0 0.0
        %559 = vmatpush2.msra.mxu0 0.0
        %560 = vmatprep.subr.mxu0 0.0
        %561 = vmatpush2.msra.mxu0 0.0
        %562 = vmatprep.subr.mxu0 0.0
        %563 = vmatpush2.msra.mxu0 0.0
        %564 = vmatprep.subr.mxu0 0.0
        %565 = vmatpush2.msra.mxu0 0.0
        %566 = vmatprep.subr.mxu0 0.0
        %567 = vmatpush2.msra.mxu0 0.0
        %568 = vmatprep.subr.mxu0 0.0
        %569 = vmatpush2.msra.mxu0 0.0
        %570 = vmatprep.subr.mxu0 0.0
        %571 = vmatpush2.msra.mxu0 0.0
        %572 = vmatprep.subr.mxu0 0.0
        %573 = vmatpush2.msra.mxu0 0.0
        %574 = vmatprep.subr.mxu0 0.0
        %575 = vmatpush2.msra.mxu0 0.0
        %576 = vmatprep.subr.mxu0 0.0
        %577 = vmatpush2.msra.mxu0 0.0
        %578 = vmatprep.subr.mxu0 0.0
        %579 = vmatpush2.msra.mxu0 0.0
        %580 = vmatprep.subr.mxu0 0.0
        %581 = vmatpush2.msra.mxu0 0.0
        %582 = vmatprep.subr.mxu0 0.0
        %583 = vmatpush2.msra.mxu0 0.0
        %584 = vmatprep.subr.mxu0 0.0
        %585 = vmatpush2.msra.mxu0 0.0
        %586 = vmatprep.mubr.f32.mxu0 0.0
        %v587 = vand.u32 %v238, 4294901760
        %588 = vmatmul.mubr.f32.gmra.mxu0 %v587
        %v589 = vpop.f32.mrf.mxu0
        %v590 = vadd.f32 %v359, %v589
        %v591 = vpop.f32.mrf.mxu0
        %592 = vmatprep.mubr.f32.mxu0 0.0
        %v593 = vand.u32 %v241, 4294901760
        %594 = vmatmul.mubr.f32.gmra.mxu0 %v593
        %v595 = vpop.f32.mrf.mxu0
        %v596 = vadd.f32 %v369, %v595
        %v597 = vpop.f32.mrf.mxu0
        %598 = vmatprep.mubr.f32.mxu0 0.0
        %v599 = vand.u32 %v244, 4294901760
        %600 = vmatmul.mubr.f32.gmra.mxu0 %v599
        %v601 = vpop.f32.mrf.mxu0
        %v602 = vadd.f32 %v379, %v601
        %v603 = vpop.f32.mrf.mxu0
        %604 = vmatprep.mubr.f32.mxu0 0.0
        %v605 = vand.u32 %v247, 4294901760
        %606 = vmatmul.mubr.f32.gmra.mxu0 %v605
        %v607 = vpop.f32.mrf.mxu0
        %v608 = vadd.f32 %v389, %v607
        %v609 = vpop.f32.mrf.mxu0
        %610 = vmatprep.mubr.f32.mxu0 0.0
        %v611 = vand.u32 %v250, 4294901760
        %612 = vmatmul.mubr.f32.gmra.mxu0 %v611
        %v613 = vpop.f32.mrf.mxu0
        %v614 = vadd.f32 %v399, %v613
        %v615 = vpop.f32.mrf.mxu0
        %616 = vmatprep.mubr.f32.mxu0 0.0
        %v617 = vand.u32 %v253, 4294901760
        %618 = vmatmul.mubr.f32.gmra.mxu0 %v617
        %v619 = vpop.f32.mrf.mxu0
        %v620 = vadd.f32 %v409, %v619
        %v621 = vpop.f32.mrf.mxu0
        %622 = vmatprep.mubr.f32.mxu0 0.0
        %v623 = vand.u32 %v256, 4294901760
        %624 = vmatmul.mubr.f32.gmra.mxu0 %v623
        %v625 = vpop.f32.mrf.mxu0
        %v626 = vadd.f32 %v419, %v625
        %v627 = vpop.f32.mrf.mxu0
        %628 = vmatprep.mubr.f32.mxu0 0.0
        %v629 = vand.u32 %v259, 4294901760
        %630 = vmatmul.mubr.f32.gmra.mxu0 %v629
        %v631 = vpop.f32.mrf.mxu0
        %v632 = vadd.f32 %v429, %v631
        %v633 = vpop.f32.mrf.mxu0
        %634 = vmatprep.mubr.f32.mxu0 0.0
        %v635 = vand.u32 %v262, 4294901760
        %636 = vmatmul.mubr.f32.gmra.mxu0 %v635
        %v637 = vpop.f32.mrf.mxu0
        %v638 = vadd.f32 %v439, %v637
        %v639 = vpop.f32.mrf.mxu0
        %640 = vmatprep.mubr.f32.mxu0 0.0
        %v641 = vand.u32 %v265, 4294901760
        %642 = vmatmul.mubr.f32.gmra.mxu0 %v641
        %v643 = vpop.f32.mrf.mxu0
        %v644 = vadd.f32 %v449, %v643
        %v645 = vpop.f32.mrf.mxu0
        %646 = vmatprep.mubr.f32.mxu0 0.0
        %v647 = vand.u32 %v268, 4294901760
        %648 = vmatmul.mubr.f32.gmra.mxu0 %v647
        %v649 = vpop.f32.mrf.mxu0
        %v650 = vadd.f32 %v459, %v649
        %v651 = vpop.f32.mrf.mxu0
        %652 = vmatprep.mubr.f32.mxu0 0.0
        %v653 = vand.u32 %v271, 4294901760
        %654 = vmatmul.mubr.f32.gmra.mxu0 %v653
        %v655 = vpop.f32.mrf.mxu0
        %v656 = vadd.f32 %v469, %v655
        %v657 = vpop.f32.mrf.mxu0
        %658 = vmatprep.mubr.f32.mxu0 0.0
        %v659 = vand.u32 %v274, 4294901760
        %660 = vmatmul.mubr.f32.gmra.mxu0 %v659
        %v661 = vpop.f32.mrf.mxu0
        %v662 = vadd.f32 %v479, %v661
        %v663 = vpop.f32.mrf.mxu0
        %664 = vmatprep.mubr.f32.mxu0 0.0
        %v665 = vand.u32 %v277, 4294901760
        %666 = vmatmul.mubr.f32.gmra.mxu0 %v665
        %v667 = vpop.f32.mrf.mxu0
        %v668 = vadd.f32 %v489, %v667
        %v669 = vpop.f32.mrf.mxu0
        %670 = vmatprep.mubr.f32.mxu0 0.0
        %v671 = vand.u32 %v280, 4294901760
        %672 = vmatmul.mubr.f32.gmra.mxu0 %v671
        %v673 = vpop.f32.mrf.mxu0
        %v674 = vadd.f32 %v499, %v673
        %v675 = vpop.f32.mrf.mxu0
        %676 = vmatprep.mubr.f32.mxu0 0.0
        %v677 = vand.u32 %v283, 4294901760
        %678 = vmatmul.mubr.f32.gmra.mxu0 %v677
        %v679 = vpop.f32.mrf.mxu0
        %v680 = vadd.f32 %v509, %v679
        %v681 = vpop.f32.mrf.mxu0
        %682 = vdwg.mxu0
        %683 = vmatprep.subr.mxu0 0.0
        %684 = vmatpush1.msra.mxu0 0.0
        %685 = vmatprep.subr.mxu0 0.0
        %686 = vmatpush1.msra.mxu0 0.0
        %687 = vmatprep.subr.mxu0 0.0
        %688 = vmatpush1.msra.mxu0 0.0
        %689 = vmatprep.subr.mxu0 0.0
        %690 = vmatpush1.msra.mxu0 0.0
        %691 = vmatprep.subr.mxu0 0.0
        %692 = vmatpush1.msra.mxu0 0.0
        %693 = vmatprep.subr.mxu0 0.0
        %694 = vmatpush1.msra.mxu0 0.0
        %695 = vmatprep.subr.mxu0 0.0
        %696 = vmatpush1.msra.mxu0 0.0
        %697 = vmatprep.subr.mxu0 0.0
        %698 = vmatpush1.msra.mxu0 0.0
        %699 = vmatprep.subr.mxu0 0.0
        %700 = vmatpush1.msra.mxu0 0.0
        %701 = vmatprep.subr.mxu0 0.0
        %702 = vmatpush1.msra.mxu0 0.0
        %703 = vmatprep.subr.mxu0 0.0
        %704 = vmatpush1.msra.mxu0 0.0
        %705 = vmatprep.subr.mxu0 0.0
        %706 = vmatpush1.msra.mxu0 0.0
        %707 = vmatprep.subr.mxu0 0.0
        %708 = vmatpush1.msra.mxu0 0.0
        %709 = vmatprep.subr.mxu0 0.0
        %710 = vmatpush1.msra.mxu0 0.0
        %711 = vmatprep.subr.mxu0 0.0
        %v712 = vand.u32 %v235, 4294901760
        %v713 = vsub.f32 %v235, %v712
        %714 = vmatpush1.msra.mxu0 %v713
        %715 = vmatprep.subr.mxu0 0.0
        %v716 = vand.u32 %v234, 4294901760
        %v717 = vsub.f32 %v234, %v716
        %718 = vmatpush1.msra.mxu0 %v717
        %719 = vmatprep.subr.mxu0 0.0
        %720 = vmatpush2.msra.mxu0 0.0
        %721 = vmatprep.subr.mxu0 0.0
        %722 = vmatpush2.msra.mxu0 0.0
        %723 = vmatprep.subr.mxu0 0.0
        %724 = vmatpush2.msra.mxu0 0.0
        %725 = vmatprep.subr.mxu0 0.0
        %726 = vmatpush2.msra.mxu0 0.0
        %727 = vmatprep.subr.mxu0 0.0
        %728 = vmatpush2.msra.mxu0 0.0
        %729 = vmatprep.subr.mxu0 0.0
        %730 = vmatpush2.msra.mxu0 0.0
        %731 = vmatprep.subr.mxu0 0.0
        %732 = vmatpush2.msra.mxu0 0.0
        %733 = vmatprep.subr.mxu0 0.0
        %734 = vmatpush2.msra.mxu0 0.0
        %735 = vmatprep.subr.mxu0 0.0
        %736 = vmatpush2.msra.mxu0 0.0
        %737 = vmatprep.subr.mxu0 0.0
        %738 = vmatpush2.msra.mxu0 0.0
        %739 = vmatprep.subr.mxu0 0.0
        %740 = vmatpush2.msra.mxu0 0.0
        %741 = vmatprep.subr.mxu0 0.0
        %742 = vmatpush2.msra.mxu0 0.0
        %743 = vmatprep.subr.mxu0 0.0
        %744 = vmatpush2.msra.mxu0 0.0
        %745 = vmatprep.subr.mxu0 0.0
        %746 = vmatpush2.msra.mxu0 0.0
        %747 = vmatprep.subr.mxu0 0.0
        %748 = vmatpush2.msra.mxu0 0.0
        %749 = vmatprep.subr.mxu0 0.0
        %750 = vmatpush2.msra.mxu0 0.0
        %751 = vmatprep.mubr.f32.mxu0 0.0
        %v752 = vand.u32 %v238, 4294901760
        %v753 = vsub.f32 %v238, %v752
        %754 = vmatmul.mubr.f32.gmra.mxu0 %v753
        %v755 = vpop.f32.mrf.mxu0
        %v756 = vadd.f32 %v590, %v755
        %v757 = vpop.f32.mrf.mxu0
        %758 = vmatprep.mubr.f32.mxu0 0.0
        %v759 = vand.u32 %v241, 4294901760
        %v760 = vsub.f32 %v241, %v759
        %761 = vmatmul.mubr.f32.gmra.mxu0 %v760
        %v762 = vpop.f32.mrf.mxu0
        %v763 = vadd.f32 %v596, %v762
        %v764 = vpop.f32.mrf.mxu0
        %765 = vmatprep.mubr.f32.mxu0 0.0
        %v766 = vand.u32 %v244, 4294901760
        %v767 = vsub.f32 %v244, %v766
        %768 = vmatmul.mubr.f32.gmra.mxu0 %v767
        %v769 = vpop.f32.mrf.mxu0
        %v770 = vadd.f32 %v602, %v769
        %v771 = vpop.f32.mrf.mxu0
        %772 = vmatprep.mubr.f32.mxu0 0.0
        %v773 = vand.u32 %v247, 4294901760
        %v774 = vsub.f32 %v247, %v773
        %775 = vmatmul.mubr.f32.gmra.mxu0 %v774
        %v776 = vpop.f32.mrf.mxu0
        %v777 = vadd.f32 %v608, %v776
        %v778 = vpop.f32.mrf.mxu0
        %779 = vmatprep.mubr.f32.mxu0 0.0
        %v780 = vand.u32 %v250, 4294901760
        %v781 = vsub.f32 %v250, %v780
        %782 = vmatmul.mubr.f32.gmra.mxu0 %v781
        %v783 = vpop.f32.mrf.mxu0
        %v784 = vadd.f32 %v614, %v783
        %v785 = vpop.f32.mrf.mxu0
        %786 = vmatprep.mubr.f32.mxu0 0.0
        %v787 = vand.u32 %v253, 4294901760
        %v788 = vsub.f32 %v253, %v787
        %789 = vmatmul.mubr.f32.gmra.mxu0 %v788
        %v790 = vpop.f32.mrf.mxu0
        %v791 = vadd.f32 %v620, %v790
        %v792 = vpop.f32.mrf.mxu0
        %793 = vmatprep.mubr.f32.mxu0 0.0
        %v794 = vand.u32 %v256, 4294901760
        %v795 = vsub.f32 %v256, %v794
        %796 = vmatmul.mubr.f32.gmra.mxu0 %v795
        %v797 = vpop.f32.mrf.mxu0
        %v798 = vadd.f32 %v626, %v797
        %v799 = vpop.f32.mrf.mxu0
        %800 = vmatprep.mubr.f32.mxu0 0.0
        %v801 = vand.u32 %v259, 4294901760
        %v802 = vsub.f32 %v259, %v801
        %803 = vmatmul.mubr.f32.gmra.mxu0 %v802
        %v804 = vpop.f32.mrf.mxu0
        %v805 = vadd.f32 %v632, %v804
        %v806 = vpop.f32.mrf.mxu0
        %807 = vmatprep.mubr.f32.mxu0 0.0
        %v808 = vand.u32 %v262, 4294901760
        %v809 = vsub.f32 %v262, %v808
        %810 = vmatmul.mubr.f32.gmra.mxu0 %v809
        %v811 = vpop.f32.mrf.mxu0
        %v812 = vadd.f32 %v638, %v811
        %v813 = vpop.f32.mrf.mxu0
        %814 = vmatprep.mubr.f32.mxu0 0.0
        %v815 = vand.u32 %v265, 4294901760
        %v816 = vsub.f32 %v265, %v815
        %817 = vmatmul.mubr.f32.gmra.mxu0 %v816
        %v818 = vpop.f32.mrf.mxu0
        %v819 = vadd.f32 %v644, %v818
        %v820 = vpop.f32.mrf.mxu0
        %821 = vmatprep.mubr.f32.mxu0 0.0
        %v822 = vand.u32 %v268, 4294901760
        %v823 = vsub.f32 %v268, %v822
        %824 = vmatmul.mubr.f32.gmra.mxu0 %v823
        %v825 = vpop.f32.mrf.mxu0
        %v826 = vadd.f32 %v650, %v825
        %v827 = vpop.f32.mrf.mxu0
        %828 = vmatprep.mubr.f32.mxu0 0.0
        %v829 = vand.u32 %v271, 4294901760
        %v830 = vsub.f32 %v271, %v829
        %831 = vmatmul.mubr.f32.gmra.mxu0 %v830
        %v832 = vpop.f32.mrf.mxu0
        %v833 = vadd.f32 %v656, %v832
        %v834 = vpop.f32.mrf.mxu0
        %835 = vmatprep.mubr.f32.mxu0 0.0
        %v836 = vand.u32 %v274, 4294901760
        %v837 = vsub.f32 %v274, %v836
        %838 = vmatmul.mubr.f32.gmra.mxu0 %v837
        %v839 = vpop.f32.mrf.mxu0
        %v840 = vadd.f32 %v662, %v839
        %v841 = vpop.f32.mrf.mxu0
        %842 = vmatprep.mubr.f32.mxu0 0.0
        %v843 = vand.u32 %v277, 4294901760
        %v844 = vsub.f32 %v277, %v843
        %845 = vmatmul.mubr.f32.gmra.mxu0 %v844
        %v846 = vpop.f32.mrf.mxu0
        %v847 = vadd.f32 %v668, %v846
        %v848 = vpop.f32.mrf.mxu0
        %849 = vmatprep.mubr.f32.mxu0 0.0
        %v850 = vand.u32 %v280, 4294901760
        %v851 = vsub.f32 %v280, %v850
        %852 = vmatmul.mubr.f32.gmra.mxu0 %v851
        %v853 = vpop.f32.mrf.mxu0
        %v854 = vadd.f32 %v674, %v853
        %v855 = vpop.f32.mrf.mxu0
        %856 = vmatprep.mubr.f32.mxu0 0.0
        %v857 = vand.u32 %v283, 4294901760
        %v858 = vsub.f32 %v283, %v857
        %859 = vmatmul.mubr.f32.gmra.mxu0 %v858
        %v860 = vpop.f32.mrf.mxu0
        %v861 = vadd.f32 %v680, %v860
        %v862 = vpop.f32.mrf.mxu0
        %863 = vdwg.mxu0
        %864 = vmatprep.subr.mxu0 0.0
        %865 = vmatpush1.msra.mxu0 0.0
        %866 = vmatprep.subr.mxu0 0.0
        %867 = vmatpush1.msra.mxu0 0.0
        %868 = vmatprep.subr.mxu0 0.0
        %869 = vmatpush1.msra.mxu0 0.0
        %870 = vmatprep.subr.mxu0 0.0
        %871 = vmatpush1.msra.mxu0 0.0
        %872 = vmatprep.subr.mxu0 0.0
        %873 = vmatpush1.msra.mxu0 0.0
        %874 = vmatprep.subr.mxu0 0.0
        %875 = vmatpush1.msra.mxu0 0.0
        %876 = vmatprep.subr.mxu0 0.0
        %877 = vmatpush1.msra.mxu0 0.0
        %878 = vmatprep.subr.mxu0 0.0
        %879 = vmatpush1.msra.mxu0 0.0
        %880 = vmatprep.subr.mxu0 0.0
        %881 = vmatpush1.msra.mxu0 0.0
        %882 = vmatprep.subr.mxu0 0.0
        %883 = vmatpush1.msra.mxu0 0.0
        %884 = vmatprep.subr.mxu0 0.0
        %885 = vmatpush1.msra.mxu0 0.0
        %886 = vmatprep.subr.mxu0 0.0
        %887 = vmatpush1.msra.mxu0 0.0
        %888 = vmatprep.subr.mxu0 0.0
        %889 = vmatpush1.msra.mxu0 0.0
        %890 = vmatprep.subr.mxu0 0.0
        %891 = vmatpush1.msra.mxu0 0.0
        %892 = vmatprep.subr.mxu0 0.0
        %v893 = vand.u32 %v235, 4294901760
        %894 = vmatpush1.msra.mxu0 %v893
        %895 = vmatprep.subr.mxu0 0.0
        %v896 = vand.u32 %v234, 4294901760
        %897 = vmatpush1.msra.mxu0 %v896
        %898 = vmatprep.subr.mxu0 0.0
        %899 = vmatpush2.msra.mxu0 0.0
        %900 = vmatprep.subr.mxu0 0.0
        %901 = vmatpush2.msra.mxu0 0.0
        %902 = vmatprep.subr.mxu0 0.0
        %903 = vmatpush2.msra.mxu0 0.0
        %904 = vmatprep.subr.mxu0 0.0
        %905 = vmatpush2.msra.mxu0 0.0
        %906 = vmatprep.subr.mxu0 0.0
        %907 = vmatpush2.msra.mxu0 0.0
        %908 = vmatprep.subr.mxu0 0.0
        %909 = vmatpush2.msra.mxu0 0.0
        %910 = vmatprep.subr.mxu0 0.0
        %911 = vmatpush2.msra.mxu0 0.0
        %912 = vmatprep.subr.mxu0 0.0
        %913 = vmatpush2.msra.mxu0 0.0
        %914 = vmatprep.subr.mxu0 0.0
        %915 = vmatpush2.msra.mxu0 0.0
        %916 = vmatprep.subr.mxu0 0.0
        %917 = vmatpush2.msra.mxu0 0.0
        %918 = vmatprep.subr.mxu0 0.0
        %919 = vmatpush2.msra.mxu0 0.0
        %920 = vmatprep.subr.mxu0 0.0
        %921 = vmatpush2.msra.mxu0 0.0
        %922 = vmatprep.subr.mxu0 0.0
        %923 = vmatpush2.msra.mxu0 0.0
        %924 = vmatprep.subr.mxu0 0.0
        %925 = vmatpush2.msra.mxu0 0.0
        %926 = vmatprep.subr.mxu0 0.0
        %927 = vmatpush2.msra.mxu0 0.0
        %928 = vmatprep.subr.mxu0 0.0
        %929 = vmatpush2.msra.mxu0 0.0
        %930 = vmatprep.mubr.f32.mxu0 0.0
        %v931 = vand.u32 %v238, 4294901760
        %v932 = vsub.f32 %v238, %v931
        %v933 = vand.u32 %v932, 4294901760
        %934 = vmatmul.mubr.f32.gmra.mxu0 %v933
        %v935 = vpop.f32.mrf.mxu0
        %v936 = vadd.f32 %v756, %v935
        %v937 = vpop.f32.mrf.mxu0
        %938 = vmatprep.mubr.f32.mxu0 0.0
        %v939 = vand.u32 %v241, 4294901760
        %v940 = vsub.f32 %v241, %v939
        %v941 = vand.u32 %v940, 4294901760
        %942 = vmatmul.mubr.f32.gmra.mxu0 %v941
        %v943 = vpop.f32.mrf.mxu0
        %v944 = vadd.f32 %v763, %v943
        %v945 = vpop.f32.mrf.mxu0
        %946 = vmatprep.mubr.f32.mxu0 0.0
        %v947 = vand.u32 %v244, 4294901760
        %v948 = vsub.f32 %v244, %v947
        %v949 = vand.u32 %v948, 4294901760
        %950 = vmatmul.mubr.f32.gmra.mxu0 %v949
        %v951 = vpop.f32.mrf.mxu0
        %v952 = vadd.f32 %v770, %v951
        %v953 = vpop.f32.mrf.mxu0
        %954 = vmatprep.mubr.f32.mxu0 0.0
        %v955 = vand.u32 %v247, 4294901760
        %v956 = vsub.f32 %v247, %v955
        %v957 = vand.u32 %v956, 4294901760
        %958 = vmatmul.mubr.f32.gmra.mxu0 %v957
        %v959 = vpop.f32.mrf.mxu0
        %v960 = vadd.f32 %v777, %v959
        %v961 = vpop.f32.mrf.mxu0
        %962 = vmatprep.mubr.f32.mxu0 0.0
        %v963 = vand.u32 %v250, 4294901760
        %v964 = vsub.f32 %v250, %v963
        %v965 = vand.u32 %v964, 4294901760
        %966 = vmatmul.mubr.f32.gmra.mxu0 %v965
        %v967 = vpop.f32.mrf.mxu0
        %v968 = vadd.f32 %v784, %v967
        %v969 = vpop.f32.mrf.mxu0
        %970 = vmatprep.mubr.f32.mxu0 0.0
        %v971 = vand.u32 %v253, 4294901760
        %v972 = vsub.f32 %v253, %v971
        %v973 = vand.u32 %v972, 4294901760
        %974 = vmatmul.mubr.f32.gmra.mxu0 %v973
        %v975 = vpop.f32.mrf.mxu0
        %v976 = vadd.f32 %v791, %v975
        %v977 = vpop.f32.mrf.mxu0
        %978 = vmatprep.mubr.f32.mxu0 0.0
        %v979 = vand.u32 %v256, 4294901760
        %v980 = vsub.f32 %v256, %v979
        %v981 = vand.u32 %v980, 4294901760
        %982 = vmatmul.mubr.f32.gmra.mxu0 %v981
        %v983 = vpop.f32.mrf.mxu0
        %v984 = vadd.f32 %v798, %v983
        %v985 = vpop.f32.mrf.mxu0
        %986 = vmatprep.mubr.f32.mxu0 0.0
        %v987 = vand.u32 %v259, 4294901760
        %v988 = vsub.f32 %v259, %v987
        %v989 = vand.u32 %v988, 4294901760
        %990 = vmatmul.mubr.f32.gmra.mxu0 %v989
        %v991 = vpop.f32.mrf.mxu0
        %v992 = vadd.f32 %v805, %v991
        %v993 = vpop.f32.mrf.mxu0
        %994 = vmatprep.mubr.f32.mxu0 0.0
        %v995 = vand.u32 %v262, 4294901760
        %v996 = vsub.f32 %v262, %v995
        %v997 = vand.u32 %v996, 4294901760
        %998 = vmatmul.mubr.f32.gmra.mxu0 %v997
        %v999 = vpop.f32.mrf.mxu0
        %v1000 = vadd.f32 %v812, %v999
        %v1001 = vpop.f32.mrf.mxu0
        %1002 = vmatprep.mubr.f32.mxu0 0.0
        %v1003 = vand.u32 %v265, 4294901760
        %v1004 = vsub.f32 %v265, %v1003
        %v1005 = vand.u32 %v1004, 4294901760
        %1006 = vmatmul.mubr.f32.gmra.mxu0 %v1005
        %v1007 = vpop.f32.mrf.mxu0
        %v1008 = vadd.f32 %v819, %v1007
        %v1009 = vpop.f32.mrf.mxu0
        %1010 = vmatprep.mubr.f32.mxu0 0.0
        %v1011 = vand.u32 %v268, 4294901760
        %v1012 = vsub.f32 %v268, %v1011
        %v1013 = vand.u32 %v1012, 4294901760
        %1014 = vmatmul.mubr.f32.gmra.mxu0 %v1013
        %v1015 = vpop.f32.mrf.mxu0
        %v1016 = vadd.f32 %v826, %v1015
        %v1017 = vpop.f32.mrf.mxu0
        %1018 = vmatprep.mubr.f32.mxu0 0.0
        %v1019 = vand.u32 %v271, 4294901760
        %v1020 = vsub.f32 %v271, %v1019
        %v1021 = vand.u32 %v1020, 4294901760
        %1022 = vmatmul.mubr.f32.gmra.mxu0 %v1021
        %v1023 = vpop.f32.mrf.mxu0
        %v1024 = vadd.f32 %v833, %v1023
        %v1025 = vpop.f32.mrf.mxu0
        %1026 = vmatprep.mubr.f32.mxu0 0.0
        %v1027 = vand.u32 %v274, 4294901760
        %v1028 = vsub.f32 %v274, %v1027
        %v1029 = vand.u32 %v1028, 4294901760
        %1030 = vmatmul.mubr.f32.gmra.mxu0 %v1029
        %v1031 = vpop.f32.mrf.mxu0
        %v1032 = vadd.f32 %v840, %v1031
        %v1033 = vpop.f32.mrf.mxu0
        %1034 = vmatprep.mubr.f32.mxu0 0.0
        %v1035 = vand.u32 %v277, 4294901760
        %v1036 = vsub.f32 %v277, %v1035
        %v1037 = vand.u32 %v1036, 4294901760
        %1038 = vmatmul.mubr.f32.gmra.mxu0 %v1037
        %v1039 = vpop.f32.mrf.mxu0
        %v1040 = vadd.f32 %v847, %v1039
        %v1041 = vpop.f32.mrf.mxu0
        %1042 = vmatprep.mubr.f32.mxu0 0.0
        %v1043 = vand.u32 %v280, 4294901760
        %v1044 = vsub.f32 %v280, %v1043
        %v1045 = vand.u32 %v1044, 4294901760
        %1046 = vmatmul.mubr.f32.gmra.mxu0 %v1045
        %v1047 = vpop.f32.mrf.mxu0
        %v1048 = vadd.f32 %v854, %v1047
        %v1049 = vpop.f32.mrf.mxu0
        %1050 = vmatprep.mubr.f32.mxu0 0.0
        %v1051 = vand.u32 %v283, 4294901760
        %v1052 = vsub.f32 %v283, %v1051
        %v1053 = vand.u32 %v1052, 4294901760
        %1054 = vmatmul.mubr.f32.gmra.mxu0 %v1053
        %v1055 = vpop.f32.mrf.mxu0
        %v1056 = vadd.f32 %v861, %v1055
        %v1057 = vpop.f32.mrf.mxu0
        %1058 = vdwg.mxu0
        %1059 = vmatprep.subr.mxu0 0.0
        %1060 = vmatpush1.msra.mxu0 0.0
        %1061 = vmatprep.subr.mxu0 0.0
        %1062 = vmatpush1.msra.mxu0 0.0
        %1063 = vmatprep.subr.mxu0 0.0
        %1064 = vmatpush1.msra.mxu0 0.0
        %1065 = vmatprep.subr.mxu0 0.0
        %1066 = vmatpush1.msra.mxu0 0.0
        %1067 = vmatprep.subr.mxu0 0.0
        %1068 = vmatpush1.msra.mxu0 0.0
        %1069 = vmatprep.subr.mxu0 0.0
        %1070 = vmatpush1.msra.mxu0 0.0
        %1071 = vmatprep.subr.mxu0 0.0
        %1072 = vmatpush1.msra.mxu0 0.0
        %1073 = vmatprep.subr.mxu0 0.0
        %1074 = vmatpush1.msra.mxu0 0.0
        %1075 = vmatprep.subr.mxu0 0.0
        %1076 = vmatpush1.msra.mxu0 0.0
        %1077 = vmatprep.subr.mxu0 0.0
        %1078 = vmatpush1.msra.mxu0 0.0
        %1079 = vmatprep.subr.mxu0 0.0
        %1080 = vmatpush1.msra.mxu0 0.0
        %1081 = vmatprep.subr.mxu0 0.0
        %1082 = vmatpush1.msra.mxu0 0.0
        %1083 = vmatprep.subr.mxu0 0.0
        %1084 = vmatpush1.msra.mxu0 0.0
        %1085 = vmatprep.subr.mxu0 0.0
        %1086 = vmatpush1.msra.mxu0 0.0
        %1087 = vmatprep.subr.mxu0 0.0
        %v1088 = vand.u32 %v235, 4294901760
        %v1089 = vsub.f32 %v235, %v1088
        %v1090 = vand.u32 %v1089, 4294901760
        %1091 = vmatpush1.msra.mxu0 %v1090
        %1092 = vmatprep.subr.mxu0 0.0
        %v1093 = vand.u32 %v234, 4294901760
        %v1094 = vsub.f32 %v234, %v1093
        %v1095 = vand.u32 %v1094, 4294901760
        %1096 = vmatpush1.msra.mxu0 %v1095
        %1097 = vmatprep.subr.mxu0 0.0
        %1098 = vmatpush2.msra.mxu0 0.0
        %1099 = vmatprep.subr.mxu0 0.0
        %1100 = vmatpush2.msra.mxu0 0.0
        %1101 = vmatprep.subr.mxu0 0.0
        %1102 = vmatpush2.msra.mxu0 0.0
        %1103 = vmatprep.subr.mxu0 0.0
        %1104 = vmatpush2.msra.mxu0 0.0
        %1105 = vmatprep.subr.mxu0 0.0
        %1106 = vmatpush2.msra.mxu0 0.0
        %1107 = vmatprep.subr.mxu0 0.0
        %1108 = vmatpush2.msra.mxu0 0.0
        %1109 = vmatprep.subr.mxu0 0.0
        %1110 = vmatpush2.msra.mxu0 0.0
        %1111 = vmatprep.subr.mxu0 0.0
        %1112 = vmatpush2.msra.mxu0 0.0
        %1113 = vmatprep.subr.mxu0 0.0
        %1114 = vmatpush2.msra.mxu0 0.0
        %1115 = vmatprep.subr.mxu0 0.0
        %1116 = vmatpush2.msra.mxu0 0.0
        %1117 = vmatprep.subr.mxu0 0.0
        %1118 = vmatpush2.msra.mxu0 0.0
        %1119 = vmatprep.subr.mxu0 0.0
        %1120 = vmatpush2.msra.mxu0 0.0
        %1121 = vmatprep.subr.mxu0 0.0
        %1122 = vmatpush2.msra.mxu0 0.0
        %1123 = vmatprep.subr.mxu0 0.0
        %1124 = vmatpush2.msra.mxu0 0.0
        %1125 = vmatprep.subr.mxu0 0.0
        %1126 = vmatpush2.msra.mxu0 0.0
        %1127 = vmatprep.subr.mxu0 0.0
        %1128 = vmatpush2.msra.mxu0 0.0
        %1129 = vmatprep.mubr.f32.mxu0 0.0
        %v1130 = vand.u32 %v238, 4294901760
        %1131 = vmatmul.mubr.f32.gmra.mxu0 %v1130
        %v1132 = vpop.f32.mrf.mxu0
        %v1133 = vadd.f32 %v936, %v1132
        %v1134 = vpop.f32.mrf.mxu0
        %1135 = vmatprep.mubr.f32.mxu0 0.0
        %v1136 = vand.u32 %v241, 4294901760
        %1137 = vmatmul.mubr.f32.gmra.mxu0 %v1136
        %v1138 = vpop.f32.mrf.mxu0
        %v1139 = vadd.f32 %v944, %v1138
        %v1140 = vpop.f32.mrf.mxu0
        %1141 = vmatprep.mubr.f32.mxu0 0.0
        %v1142 = vand.u32 %v244, 4294901760
        %1143 = vmatmul.mubr.f32.gmra.mxu0 %v1142
        %v1144 = vpop.f32.mrf.mxu0
        %v1145 = vadd.f32 %v952, %v1144
        %v1146 = vpop.f32.mrf.mxu0
        %1147 = vmatprep.mubr.f32.mxu0 0.0
        %v1148 = vand.u32 %v247, 4294901760
        %1149 = vmatmul.mubr.f32.gmra.mxu0 %v1148
        %v1150 = vpop.f32.mrf.mxu0
        %v1151 = vadd.f32 %v960, %v1150
        %v1152 = vpop.f32.mrf.mxu0
        %1153 = vmatprep.mubr.f32.mxu0 0.0
        %v1154 = vand.u32 %v250, 4294901760
        %1155 = vmatmul.mubr.f32.gmra.mxu0 %v1154
        %v1156 = vpop.f32.mrf.mxu0
        %v1157 = vadd.f32 %v968, %v1156
        %v1158 = vpop.f32.mrf.mxu0
        %1159 = vmatprep.mubr.f32.mxu0 0.0
        %v1160 = vand.u32 %v253, 4294901760
        %1161 = vmatmul.mubr.f32.gmra.mxu0 %v1160
        %v1162 = vpop.f32.mrf.mxu0
        %v1163 = vadd.f32 %v976, %v1162
        %v1164 = vpop.f32.mrf.mxu0
        %1165 = vmatprep.mubr.f32.mxu0 0.0
        %v1166 = vand.u32 %v256, 4294901760
        %1167 = vmatmul.mubr.f32.gmra.mxu0 %v1166
        %v1168 = vpop.f32.mrf.mxu0
        %v1169 = vadd.f32 %v984, %v1168
        %v1170 = vpop.f32.mrf.mxu0
        %1171 = vmatprep.mubr.f32.mxu0 0.0
        %v1172 = vand.u32 %v259, 4294901760
        %1173 = vmatmul.mubr.f32.gmra.mxu0 %v1172
        %v1174 = vpop.f32.mrf.mxu0
        %v1175 = vadd.f32 %v992, %v1174
        %v1176 = vpop.f32.mrf.mxu0
        %1177 = vmatprep.mubr.f32.mxu0 0.0
        %v1178 = vand.u32 %v262, 4294901760
        %1179 = vmatmul.mubr.f32.gmra.mxu0 %v1178
        %v1180 = vpop.f32.mrf.mxu0
        %v1181 = vadd.f32 %v1000, %v1180
        %v1182 = vpop.f32.mrf.mxu0
        %1183 = vmatprep.mubr.f32.mxu0 0.0
        %v1184 = vand.u32 %v265, 4294901760
        %1185 = vmatmul.mubr.f32.gmra.mxu0 %v1184
        %v1186 = vpop.f32.mrf.mxu0
        %v1187 = vadd.f32 %v1008, %v1186
        %v1188 = vpop.f32.mrf.mxu0
        %1189 = vmatprep.mubr.f32.mxu0 0.0
        %v1190 = vand.u32 %v268, 4294901760
        %1191 = vmatmul.mubr.f32.gmra.mxu0 %v1190
        %v1192 = vpop.f32.mrf.mxu0
        %v1193 = vadd.f32 %v1016, %v1192
        %v1194 = vpop.f32.mrf.mxu0
        %1195 = vmatprep.mubr.f32.mxu0 0.0
        %v1196 = vand.u32 %v271, 4294901760
        %1197 = vmatmul.mubr.f32.gmra.mxu0 %v1196
        %v1198 = vpop.f32.mrf.mxu0
        %v1199 = vadd.f32 %v1024, %v1198
        %v1200 = vpop.f32.mrf.mxu0
        %1201 = vmatprep.mubr.f32.mxu0 0.0
        %v1202 = vand.u32 %v274, 4294901760
        %1203 = vmatmul.mubr.f32.gmra.mxu0 %v1202
        %v1204 = vpop.f32.mrf.mxu0
        %v1205 = vadd.f32 %v1032, %v1204
        %v1206 = vpop.f32.mrf.mxu0
        %1207 = vmatprep.mubr.f32.mxu0 0.0
        %v1208 = vand.u32 %v277, 4294901760
        %1209 = vmatmul.mubr.f32.gmra.mxu0 %v1208
        %v1210 = vpop.f32.mrf.mxu0
        %v1211 = vadd.f32 %v1040, %v1210
        %v1212 = vpop.f32.mrf.mxu0
        %1213 = vmatprep.mubr.f32.mxu0 0.0
        %v1214 = vand.u32 %v280, 4294901760
        %1215 = vmatmul.mubr.f32.gmra.mxu0 %v1214
        %v1216 = vpop.f32.mrf.mxu0
        %v1217 = vadd.f32 %v1048, %v1216
        %v1218 = vpop.f32.mrf.mxu0
        %1219 = vmatprep.mubr.f32.mxu0 0.0
        %v1220 = vand.u32 %v283, 4294901760
        %1221 = vmatmul.mubr.f32.gmra.mxu0 %v1220
        %v1222 = vpop.f32.mrf.mxu0
        %v1223 = vadd.f32 %v1056, %v1222
        %v1224 = vpop.f32.mrf.mxu0
        %1225 = vdwg.mxu0
        %1226 = vmatprep.subr.mxu0 0.0
        %1227 = vmatpush1.msra.mxu0 0.0
        %1228 = vmatprep.subr.mxu0 0.0
        %1229 = vmatpush1.msra.mxu0 0.0
        %1230 = vmatprep.subr.mxu0 0.0
        %1231 = vmatpush1.msra.mxu0 0.0
        %1232 = vmatprep.subr.mxu0 0.0
        %1233 = vmatpush1.msra.mxu0 0.0
        %1234 = vmatprep.subr.mxu0 0.0
        %1235 = vmatpush1.msra.mxu0 0.0
        %1236 = vmatprep.subr.mxu0 0.0
        %1237 = vmatpush1.msra.mxu0 0.0
        %1238 = vmatprep.subr.mxu0 0.0
        %1239 = vmatpush1.msra.mxu0 0.0
        %1240 = vmatprep.subr.mxu0 0.0
        %1241 = vmatpush1.msra.mxu0 0.0
        %1242 = vmatprep.subr.mxu0 0.0
        %1243 = vmatpush1.msra.mxu0 0.0
        %1244 = vmatprep.subr.mxu0 0.0
        %1245 = vmatpush1.msra.mxu0 0.0
        %1246 = vmatprep.subr.mxu0 0.0
        %1247 = vmatpush1.msra.mxu0 0.0
        %1248 = vmatprep.subr.mxu0 0.0
        %1249 = vmatpush1.msra.mxu0 0.0
        %1250 = vmatprep.subr.mxu0 0.0
        %1251 = vmatpush1.msra.mxu0 0.0
        %1252 = vmatprep.subr.mxu0 0.0
        %1253 = vmatpush1.msra.mxu0 0.0
        %1254 = vmatprep.subr.mxu0 0.0
        %v1255 = vand.u32 %v235, 4294901760
        %1256 = vmatpush1.msra.mxu0 %v1255
        %1257 = vmatprep.subr.mxu0 0.0
        %v1258 = vand.u32 %v234, 4294901760
        %1259 = vmatpush1.msra.mxu0 %v1258
        %1260 = vmatprep.subr.mxu0 0.0
        %1261 = vmatpush2.msra.mxu0 0.0
        %1262 = vmatprep.subr.mxu0 0.0
        %1263 = vmatpush2.msra.mxu0 0.0
        %1264 = vmatprep.subr.mxu0 0.0
        %1265 = vmatpush2.msra.mxu0 0.0
        %1266 = vmatprep.subr.mxu0 0.0
        %1267 = vmatpush2.msra.mxu0 0.0
        %1268 = vmatprep.subr.mxu0 0.0
        %1269 = vmatpush2.msra.mxu0 0.0
        %1270 = vmatprep.subr.mxu0 0.0
        %1271 = vmatpush2.msra.mxu0 0.0
        %1272 = vmatprep.subr.mxu0 0.0
        %1273 = vmatpush2.msra.mxu0 0.0
        %1274 = vmatprep.subr.mxu0 0.0
        %1275 = vmatpush2.msra.mxu0 0.0
        %1276 = vmatprep.subr.mxu0 0.0
        %1277 = vmatpush2.msra.mxu0 0.0
        %1278 = vmatprep.subr.mxu0 0.0
        %1279 = vmatpush2.msra.mxu0 0.0
        %1280 = vmatprep.subr.mxu0 0.0
        %1281 = vmatpush2.msra.mxu0 0.0
        %1282 = vmatprep.subr.mxu0 0.0
        %1283 = vmatpush2.msra.mxu0 0.0
        %1284 = vmatprep.subr.mxu0 0.0
        %1285 = vmatpush2.msra.mxu0 0.0
        %1286 = vmatprep.subr.mxu0 0.0
        %1287 = vmatpush2.msra.mxu0 0.0
        %1288 = vmatprep.subr.mxu0 0.0
        %1289 = vmatpush2.msra.mxu0 0.0
        %1290 = vmatprep.subr.mxu0 0.0
        %1291 = vmatpush2.msra.mxu0 0.0
        %1292 = vmatprep.mubr.f32.mxu0 0.0
        %v1293 = vand.u32 %v238, 4294901760
        %1294 = vmatmul.mubr.f32.gmra.mxu0 %v1293
        %v1295 = vpop.f32.mrf.mxu0
        %v1296 = vadd.f32 %v1133, %v1295
        %v1297 = vpop.f32.mrf.mxu0
        %1298 = vmatprep.mubr.f32.mxu0 0.0
        %v1299 = vand.u32 %v241, 4294901760
        %1300 = vmatmul.mubr.f32.gmra.mxu0 %v1299
        %v1301 = vpop.f32.mrf.mxu0
        %v1302 = vadd.f32 %v1139, %v1301
        %v1303 = vpop.f32.mrf.mxu0
        %1304 = vmatprep.mubr.f32.mxu0 0.0
        %v1305 = vand.u32 %v244, 4294901760
        %1306 = vmatmul.mubr.f32.gmra.mxu0 %v1305
        %v1307 = vpop.f32.mrf.mxu0
        %v1308 = vadd.f32 %v1145, %v1307
        %v1309 = vpop.f32.mrf.mxu0
        %1310 = vmatprep.mubr.f32.mxu0 0.0
        %v1311 = vand.u32 %v247, 4294901760
        %1312 = vmatmul.mubr.f32.gmra.mxu0 %v1311
        %v1313 = vpop.f32.mrf.mxu0
        %v1314 = vadd.f32 %v1151, %v1313
        %v1315 = vpop.f32.mrf.mxu0
        %1316 = vmatprep.mubr.f32.mxu0 0.0
        %v1317 = vand.u32 %v250, 4294901760
        %1318 = vmatmul.mubr.f32.gmra.mxu0 %v1317
        %v1319 = vpop.f32.mrf.mxu0
        %v1320 = vadd.f32 %v1157, %v1319
        %v1321 = vpop.f32.mrf.mxu0
        %1322 = vmatprep.mubr.f32.mxu0 0.0
        %v1323 = vand.u32 %v253, 4294901760
        %1324 = vmatmul.mubr.f32.gmra.mxu0 %v1323
        %v1325 = vpop.f32.mrf.mxu0
        %v1326 = vadd.f32 %v1163, %v1325
        %v1327 = vpop.f32.mrf.mxu0
        %1328 = vmatprep.mubr.f32.mxu0 0.0
        %v1329 = vand.u32 %v256, 4294901760
        %1330 = vmatmul.mubr.f32.gmra.mxu0 %v1329
        %v1331 = vpop.f32.mrf.mxu0
        %v1332 = vadd.f32 %v1169, %v1331
        %v1333 = vpop.f32.mrf.mxu0
        %1334 = vmatprep.mubr.f32.mxu0 0.0
        %v1335 = vand.u32 %v259, 4294901760
        %1336 = vmatmul.mubr.f32.gmra.mxu0 %v1335
        %v1337 = vpop.f32.mrf.mxu0
        %v1338 = vadd.f32 %v1175, %v1337
        %v1339 = vpop.f32.mrf.mxu0
        %1340 = vmatprep.mubr.f32.mxu0 0.0
        %v1341 = vand.u32 %v262, 4294901760
        %1342 = vmatmul.mubr.f32.gmra.mxu0 %v1341
        %v1343 = vpop.f32.mrf.mxu0
        %v1344 = vadd.f32 %v1181, %v1343
        %v1345 = vpop.f32.mrf.mxu0
        %1346 = vmatprep.mubr.f32.mxu0 0.0
        %v1347 = vand.u32 %v265, 4294901760
        %1348 = vmatmul.mubr.f32.gmra.mxu0 %v1347
        %v1349 = vpop.f32.mrf.mxu0
        %v1350 = vadd.f32 %v1187, %v1349
        %v1351 = vpop.f32.mrf.mxu0
        %1352 = vmatprep.mubr.f32.mxu0 0.0
        %v1353 = vand.u32 %v268, 4294901760
        %1354 = vmatmul.mubr.f32.gmra.mxu0 %v1353
        %v1355 = vpop.f32.mrf.mxu0
        %v1356 = vadd.f32 %v1193, %v1355
        %v1357 = vpop.f32.mrf.mxu0
        %1358 = vmatprep.mubr.f32.mxu0 0.0
        %v1359 = vand.u32 %v271, 4294901760
        %1360 = vmatmul.mubr.f32.gmra.mxu0 %v1359
        %v1361 = vpop.f32.mrf.mxu0
        %v1362 = vadd.f32 %v1199, %v1361
        %v1363 = vpop.f32.mrf.mxu0
        %1364 = vmatprep.mubr.f32.mxu0 0.0
        %v1365 = vand.u32 %v274, 4294901760
        %1366 = vmatmul.mubr.f32.gmra.mxu0 %v1365
        %v1367 = vpop.f32.mrf.mxu0
        %v1368 = vadd.f32 %v1205, %v1367
        %v1369 = vpop.f32.mrf.mxu0
        %1370 = vmatprep.mubr.f32.mxu0 0.0
        %v1371 = vand.u32 %v277, 4294901760
        %1372 = vmatmul.mubr.f32.gmra.mxu0 %v1371
        %v1373 = vpop.f32.mrf.mxu0
        %v1374 = vadd.f32 %v1211, %v1373
        %v1375 = vpop.f32.mrf.mxu0
        %1376 = vmatprep.mubr.f32.mxu0 0.0
        %v1377 = vand.u32 %v280, 4294901760
        %1378 = vmatmul.mubr.f32.gmra.mxu0 %v1377
        %v1379 = vpop.f32.mrf.mxu0
        %v1380 = vadd.f32 %v1217, %v1379
        %v1381 = vpop.f32.mrf.mxu0
        %1382 = vmatprep.mubr.f32.mxu0 0.0
        %v1383 = vand.u32 %v283, 4294901760
        %1384 = vmatmul.mubr.f32.gmra.mxu0 %v1383
        %v1385 = vpop.f32.mrf.mxu0
        %v1386 = vadd.f32 %v1223, %v1385
        %v1387 = vpop.f32.mrf.mxu0
        %1388 = vdwg.mxu0
        %1389 = vst [vmem:[%s210] sm:$0xff] %v1296
        %1390 = vst [vmem:[%s210 + $0x8] sm:$0xff] %v1302
        %1391 = vst [vmem:[%s210 + $0x10] sm:$0xff] %v1308
        %1392 = vst [vmem:[%s210 + $0x18] sm:$0xff] %v1314
        %1393 = vst [vmem:[%s210 + $0x20] sm:$0xff] %v1320
        %1394 = vst [vmem:[%s210 + $0x28] sm:$0xff] %v1326
        %1395 = vst [vmem:[%s210 + $0x30] sm:$0xff] %v1332
        %1396 = vst [vmem:[%s210 + $0x38] sm:$0xff] %v1338
        %1397 = vst [vmem:[%s210 + $0x40] sm:$0xff] %v1344
        %1398 = vst [vmem:[%s210 + $0x48] sm:$0xff] %v1350
        %1399 = vst [vmem:[%s210 + $0x50] sm:$0xff] %v1356
        %1400 = vst [vmem:[%s210 + $0x58] sm:$0xff] %v1362
        %1401 = vst [vmem:[%s210 + $0x60] sm:$0xff] %v1368
        %1402 = vst [vmem:[%s210 + $0x68] sm:$0xff] %v1374
        %1403 = vst [vmem:[%s210 + $0x70] sm:$0xff] %v1380
        %1404 = vst [vmem:[%s210 + $0x78] sm:$0xff] %v1386
        %s1405 = sand.u32 %s90, 1
        %s1406 = scalar_lea.sflag [#allocation4], %s1405
        %s1407 = sand.u32 %s90, 1
        %s1408 = smul.addr %s1407, 128
        %s1409 = scalar_lea.vmem [#allocation3], %s1408
        // Predicated region
        $region67: #{tpu_custom_call.1} parent=61 // pred_check
          %p1410 = pneg %p100
        $region68: #{tpu_custom_call.1} parent=61 // pred_check_branch
          %1412 = sbr.rel (%p1410) target = $region70
        $region69: #{tpu_custom_call.1} parent=61 // pred_region
          %s1413 = smul.u32 16, %s20
          %s1415 = ssub.s32 2048, 2048
          %1416 = vsyncadd %s1406, %s1415
          %s1417 = smul.addr %s1413, 2
          %s1418 = sadd.s32 %s21, %s1417
          %s1419 = smul.addr %s1418, 128
          %s1420 = scalar_lea.hbm %s2, %s1419
          %s1421 = sshll.u32 %s1409, 4
          %s1422 = int_to_ptr.vmem [resolvable:$true] %s1421
          %1427 = dma.vmem_to_hbm [thread:$0]  %s1422, 2048, %s1420, %s1406, 128, 256, 8
        $region70: #{tpu_custom_call.1} parent=61 // pred_fallthru
          _
      $region62: #{tpu_custom_call.1} parent=5 // pred_fallthru
        _
      %p1428 = scmp.le.s32.totalorder 2, %s11
      // Predicated region
      $region71: #{tpu_custom_call.1} parent=5 // pred_check
        %p1429 = pneg %p1428
      $region72: #{tpu_custom_call.1} parent=5 // pred_check_branch
        %1431 = sbr.rel (%p1429) target = $region74
      $region73: #{tpu_custom_call.1} parent=5 // pred_region
        %s1432 = ssub.s32 %s11, 2
        // Predicated region
        $region75: #{tpu_custom_call.1} parent=73 // pred_check
          %p1433 = pneg %p106
        $region76: #{tpu_custom_call.1} parent=73 // pred_check_branch
          %1435 = sbr.rel (%p1433) target = $region78
        $region77: #{tpu_custom_call.1} parent=73 // pred_region
          %s1436 = sand.u32 %s91, 1
          %s1437 = scalar_lea.sflag [#allocation4], %s1436
          %s1438 = sand.u32 %s91, 1
          %s1439 = smul.addr %s1438, 128
          %s1440 = scalar_lea.vmem [#allocation3], %s1439
          %1441 = dma.done %s1437, 2048
        $region78: #{tpu_custom_call.1} parent=73 // pred_fallthru
          _
      $region74: #{tpu_custom_call.1} parent=5 // pred_fallthru
        _
    $region6: #{tpu_custom_call.1} parent=1 // loop_footer
      %s15 = sadd.s32 1, %s11
    $region7: #{tpu_custom_call.1} parent=1 // loop_footer_branch
      %10 = sbr.rel target = $region3
    $region8: #{tpu_custom_call.1} parent=1 // loop_exit
      _
    %1442 = vsyncpa [#allocation4], 1
    %s1443 = scalar_lea.sflag [#allocation4], 1
    %1444 = vsyncpa %s1443, 1

</llo_original>
